<compile_context>
chip_gen: v5e
topology: v5e:2x2
jax: 0.10.0
libtpu: 0.0.40
codegen_flags: <defaults>
</compile_context>

<pallas_src>
import functools

import jax
import jax.numpy as jnp
from jax import lax
from jax.experimental import pallas as pl
from jax.experimental.pallas import tpu as pltpu


def _conv3x3_elu_kernel(x_ref, w_ref, b_ref, o_ref, pad_ref, *, tile_h, out_w, n_h):
    # x_ref   : (H, W, Cin)          un-padded NHWC image of one batch element (resident)
    # w_ref   : (3, 3*Cin, Cpad)     conv weights folded over (kx, ci); ky = leading axis
    # b_ref   : (1, Cpad)            bias
    # o_ref   : (tile_h*W, Cpad)     output tile
    # pad_ref : (tile_h+2, W+2, Cin) VMEM scratch: zero-padded slab for this row tile
    cin = x_ref.shape[-1]
    th, W = tile_h, out_w
    h = pl.program_id(1)

    # ---- ZeroPad2d(1) in VMEM: build the padded slab for this tile. ----------------
    zero_col = jnp.zeros((th + 2, 1, cin), pad_ref.dtype)
    pad_ref[:, 0:1, :] = zero_col                       # left pad column
    pad_ref[:, W + 1:W + 2, :] = zero_col               # right pad column
    zero_row = jnp.zeros((1, W + 2, cin), pad_ref.dtype)

    if n_h == 1:
        pad_ref[0:1, :, :] = zero_row
        pad_ref[th + 1:th + 2, :, :] = zero_row
        pad_ref[1:th + 1, 1:W + 1, :] = x_ref[...]
    else:
        img_h = x_ref.shape[0]

        @pl.when(h == 0)
        def _():
            pad_ref[0:1, :, :] = zero_row
            pad_ref[1:th + 2, 1:W + 1, :] = x_ref[0:th + 1, :, :]

        @pl.when(h == n_h - 1)
        def _():
            pad_ref[th + 1:th + 2, :, :] = zero_row
            pad_ref[0:th + 1, 1:W + 1, :] = x_ref[img_h - th - 1:img_h, :, :]

        if n_h > 2:
            @pl.when(jnp.logical_and(h > 0, h < n_h - 1))
            def _():
                row0 = h * th
                pad_ref[:, 1:W + 1, :] = x_ref[pl.ds(row0 - 1, th + 2), :, :]

    # ---- kx fold: build xk once per tile, reuse across ky via free leading slices. --
    xk = jnp.concatenate(
        [pad_ref[:, 0:W, :], pad_ref[:, 1:W + 1, :], pad_ref[:, 2:W + 2, :]],
        axis=-1).astype(w_ref.dtype)                    # (th+2, W, 3*cin)

    # ---- 3 accumulating MXU dots (K = 3*cin each), f32 accumulation. ----------------
    acc = jnp.dot(xk[0:th].reshape(th * W, 3 * cin), w_ref[0],
                  preferred_element_type=jnp.float32)
    for ky in (1, 2):
        acc = acc + jnp.dot(xk[ky:ky + th].reshape(th * W, 3 * cin), w_ref[ky],
                            preferred_element_type=jnp.float32)
    y = acc + b_ref[...]

    # ---- ELU (alpha=1): single EUP exp; argument clamped so the unselected branch
    # cannot overflow.
    yn = jnp.minimum(y, 0.0)
    o_ref[...] = jnp.where(y > 0.0, y, jnp.exp(yn) - 1.0).astype(o_ref.dtype)


def _tile_vmem_bytes(th, W, cin, cpad, in_elt=4):
    """VMEM bytes that scale with the row tile (scratch slab, xk, lhs, acc, 2x out)."""
    pad_slab = (th + 2) * (W + 2) * cin * in_elt
    xk = (th + 2) * W * 3 * cin * in_elt
    lhs = th * W * 3 * cin * in_elt
    acc = th * W * cpad * 4
    out2 = 2 * th * W * cpad * 4
    return pad_slab + xk + lhs + acc + out2


def _fixed_vmem_bytes(H, W, cin, cpad, w_elt=4, in_elt=4):
    resident_img = 2 * H * W * cin * in_elt      # default double-buffered input block
    weights = 2 * 9 * cin * cpad * w_elt
    bias = 2 * cpad * 4
    return resident_img + weights + bias


def _pick_tile_rows(H, W, cin, cpad, tile_budget_bytes=4 << 20):
    """Largest row tile that divides H and keeps the TH-scaled VMEM within budget;
    falls back to the smallest legal tile (never the whole image) if nothing fits."""
    divisors = [d for d in range(1, H + 1) if H % d == 0]
    fitting = [d for d in divisors if _tile_vmem_bytes(d, W, cin, cpad) <= tile_budget_bytes]
    return max(fitting) if fitting else min(divisors)


def wav_conv_block(x_nchw, weight_hwio, bias, *, tile_rows=None, use_bf16=False):
    """x_nchw: (B, Cin, H, W); weight_hwio: (3, 3, Cin, Cout); bias: (Cout,)."""
    B, Cin, H, W = x_nchw.shape
    KH, KW, Cin_w, Cout = weight_hwio.shape
    assert (KH, KW, Cin_w) == (3, 3, Cin)
    if W % 8 != 0:
        raise ValueError("W must be a multiple of 8 (sublane-aligned in-kernel reshapes).")

    LANES = 128
    # Lane-pad the output channels only when it matters (Cout >= 128); small Cout is
    # stored at true width to avoid inflating HBM writeback by 128/Cout.
    Cpad = ((Cout + LANES - 1) // LANES) * LANES if Cout >= LANES else Cout

    TH = _pick_tile_rows(H, W, Cin, Cpad) if tile_rows is None else int(tile_rows)
    if H % TH != 0:
        raise ValueError(f"tile_rows={TH} must divide H={H}")
    n_h = H // TH

    # Glue: NCHW -> NHWC (module I/O convention). No jnp.pad: ZeroPad2d is in-kernel.
    x_nhwc = jnp.transpose(x_nchw, (0, 2, 3, 1)).astype(jnp.float32)

    mxu_dtype = jnp.bfloat16 if use_bf16 else jnp.float32
    # Fold (kx, ci) onto the contraction axis; ky stays a free leading index.
    w_folded = weight_hwio.astype(mxu_dtype).reshape(3, 3 * Cin, Cout)
    b_folded = bias.astype(jnp.float32).reshape(1, Cout)
    if Cpad != Cout:
        w_folded = jnp.pad(w_folded, ((0, 0), (0, 0), (0, Cpad - Cout)))
        b_folded = jnp.pad(b_folded, ((0, 0), (0, Cpad - Cout)))

    w_bytes = 2 if use_bf16 else 4
    vmem_needed = (_fixed_vmem_bytes(H, W, Cin, Cpad, w_elt=w_bytes)
                   + _tile_vmem_bytes(TH, W, Cin, Cpad))
    vmem_limit = int(min(64 << 20, max(16 << 20, 2 * vmem_needed)))

    kernel = functools.partial(_conv3x3_elu_kernel, tile_h=TH, out_w=W, n_h=n_h)

    out_flat = pl.pallas_call(
        kernel,
        out_shape=jax.ShapeDtypeStruct((B, H * W, Cpad), jnp.float32),
        grid=(B, n_h),
        in_specs=[
            # Whole un-padded image per batch element; constant index over the row axis
            # => DMA'd once per b and VMEM-resident across its row tiles.
            pl.BlockSpec((None, H, W, Cin), lambda b, h: (b, 0, 0, 0)),
            pl.BlockSpec((3, 3 * Cin, Cpad), lambda b, h: (0, 0, 0)),
            pl.BlockSpec((1, Cpad), lambda b, h: (0, 0)),
        ],
        out_specs=pl.BlockSpec((None, TH * W, Cpad), lambda b, h: (b, h, 0)),
        scratch_shapes=[pltpu.VMEM((TH + 2, W + 2, Cin), jnp.float32)],
        compiler_params=pltpu.CompilerParams(
            # Only the batch axis is megacore-parallel: avoids both v7x cores fetching
            # the same resident image; the row axis is a plain sequential loop.
            dimension_semantics=("parallel", "arbitrary"),
            vmem_limit_bytes=vmem_limit),
    )(x_nhwc, w_folded, b_folded)

    out = out_flat if Cpad == Cout else out_flat[:, :, :Cout]
    out = out.reshape(B, H, W, Cout)
    return jnp.transpose(out, (0, 3, 1, 2))


def _reference(x_nchw, weight_hwio, bias):
    """Pure-JAX reference: zero-pad 3x3 conv + bias + ELU, NCHW in/out."""
    w_oihw = jnp.transpose(weight_hwio, (3, 2, 0, 1))  # (Cout, Cin, 3, 3)
    y = lax.conv_general_dilated(
        x_nchw, w_oihw, window_strides=(1, 1), padding=((1, 1), (1, 1)),
        dimension_numbers=("NCHW", "OIHW", "NCHW"))
    y = y + bias.reshape(1, -1, 1, 1)
    return jax.nn.elu(y)


if __name__ == "__main__":
    B, Cin, Cout, H, W = 2, 4, 8, 16, 16

    key = jax.random.PRNGKey(0)
    kx, kw, kb = jax.random.split(key, 3)

    x = jax.random.normal(kx, (B, Cin, H, W), dtype=jnp.float32)
    # Deterministic synthetic parameters (nn.Conv2d(Cin, Cout, 3) init ranges).
    fan_in = Cin * 3 * 3
    bound = 1.0 / (fan_in ** 0.5)
    weight_hwio = jax.random.uniform(kw, (3, 3, Cin, Cout), jnp.float32,
                                     minval=-bound, maxval=bound)
    bias = jax.random.uniform(kb, (Cout,), jnp.float32,
                              minval=-bound, maxval=bound)

    ref = jax.block_until_ready(_reference(x, weight_hwio, bias))

    # Default tiling (whole image fits one row tile at this size), exact f32 path.
    out = jax.block_until_ready(wav_conv_block(x, weight_hwio, bias))
    assert out.shape == (B, Cout, H, W)
    assert jnp.max(jnp.abs(out - ref)) < 2e-4

    # Multi-tile path (exercises first / middle / last boundary handling), f32.
    out4 = jax.block_until_ready(wav_conv_block(x, weight_hwio, bias, tile_rows=4))
    assert jnp.max(jnp.abs(out4 - ref)) < 2e-4

    # bf16 MXU operands (f32 accumulation) behind a flag; looser tolerance.
    outb = jax.block_until_ready(
        wav_conv_block(x, weight_hwio, bias, tile_rows=8, use_bf16=True))
    assert jnp.max(jnp.abs(outb - ref)) < 1e-1

    print("KERNEL_OK")
</pallas_src>

<mosaic_0001>
module attributes {stable_mosaic.version = 11 : i64} {
  func.func @_conv3x3_elu_kernel(%arg0: i32, %arg1: i32, %arg2: memref<1x16x16x4xf32, #tpu.memory_space<vmem>>, %arg3: memref<3x12x8xf32, #tpu.memory_space<vmem>>, %arg4: memref<1x8xf32, #tpu.memory_space<vmem>>, %arg5: memref<1x256x8xf32, #tpu.memory_space<vmem>>, %arg6: memref<18x18x4xf32, #tpu.memory_space<vmem>>) attributes {dimension_semantics = [#tpu.dimension_semantics<parallel>, #tpu.dimension_semantics<arbitrary>], iteration_bounds = array<i64: 2, 1>, scalar_prefetch = 0 : i64, scratch_operands = 1 : i64, tpu.core_type = #tpu.core_type<tc>, window_params = [{transform_indices = @transform_0, window_bounds = array<i64: 1, 16, 16, 4>}, {pipeline_mode = #tpu.pipeline_mode<synchronous>, transform_indices = @transform_1, window_bounds = array<i64: 3, 12, 8>}, {pipeline_mode = #tpu.pipeline_mode<synchronous>, transform_indices = @transform_2, window_bounds = array<i64: 1, 8>}, {transform_indices = @transform_3, window_bounds = array<i64: 1, 256, 8>}]} {
    %cst = arith.constant 0.000000e+00 : f32
    %0 = vector.broadcast %cst : f32 to vector<18x1x4xf32>
    %c0 = arith.constant 0 : index
    %c0_0 = arith.constant 0 : index
    %c0_1 = arith.constant 0 : index
    %1 = vector.load %arg6[%c0, %c0_0, %c0_1] : memref<18x18x4xf32, #tpu.memory_space<vmem>>, vector<18x1x4xf32>
    tpu.vector_store %arg6[%c0, %c0_0, %c0_1], %0 {strides = array<i32>} : memref<18x18x4xf32, #tpu.memory_space<vmem>>, vector<18x1x4xf32>,
    %c0_2 = arith.constant 0 : index
    %c17 = arith.constant 17 : index
    %c0_3 = arith.constant 0 : index
    %2 = vector.load %arg6[%c0_2, %c17, %c0_3] : memref<18x18x4xf32, #tpu.memory_space<vmem>>, vector<18x1x4xf32>
    tpu.vector_store %arg6[%c0_2, %c17, %c0_3], %0 {strides = array<i32>} : memref<18x18x4xf32, #tpu.memory_space<vmem>>, vector<18x1x4xf32>,
    %cst_4 = arith.constant 0.000000e+00 : f32
    %3 = vector.broadcast %cst_4 : f32 to vector<1x18x4xf32>
    %c0_5 = arith.constant 0 : index
    %c0_6 = arith.constant 0 : index
    %c0_7 = arith.constant 0 : index
    %4 = vector.load %arg6[%c0_5, %c0_6, %c0_7] : memref<18x18x4xf32, #tpu.memory_space<vmem>>, vector<1x18x4xf32>
    tpu.vector_store %arg6[%c0_5, %c0_6, %c0_7], %3 {strides = array<i32>} : memref<18x18x4xf32, #tpu.memory_space<vmem>>, vector<1x18x4xf32>,
    %c17_8 = arith.constant 17 : index
    %c0_9 = arith.constant 0 : index
    %c0_10 = arith.constant 0 : index
    %5 = vector.load %arg6[%c17_8, %c0_9, %c0_10] : memref<18x18x4xf32, #tpu.memory_space<vmem>>, vector<1x18x4xf32>
    tpu.vector_store %arg6[%c17_8, %c0_9, %c0_10], %3 {strides = array<i32>} : memref<18x18x4xf32, #tpu.memory_space<vmem>>, vector<1x18x4xf32>,
    %c0_11 = arith.constant 0 : index
    %c0_12 = arith.constant 0 : index
    %c0_13 = arith.constant 0 : index
    %c0_14 = arith.constant 0 : index
    %6 = vector.load %arg2[%c0_11, %c0_12, %c0_13, %c0_14] : memref<1x16x16x4xf32, #tpu.memory_space<vmem>>, vector<1x16x16x4xf32>
    %7 = vector.shape_cast %6 : vector<1x16x16x4xf32> to vector<16x16x4xf32>
    %c1 = arith.constant 1 : index
    %c1_15 = arith.constant 1 : index
    %c0_16 = arith.constant 0 : index
    %8 = vector.load %arg6[%c1, %c1_15, %c0_16] : memref<18x18x4xf32, #tpu.memory_space<vmem>>, vector<16x16x4xf32>
    tpu.vector_store %arg6[%c1, %c1_15, %c0_16], %7 {strides = array<i32>} : memref<18x18x4xf32, #tpu.memory_space<vmem>>, vector<16x16x4xf32>,
    %c0_17 = arith.constant 0 : index
    %c0_18 = arith.constant 0 : index
    %c0_19 = arith.constant 0 : index
    %9 = vector.load %arg6[%c0_17, %c0_18, %c0_19] : memref<18x18x4xf32, #tpu.memory_space<vmem>>, vector<18x16x4xf32>
    %c0_20 = arith.constant 0 : index
    %c1_21 = arith.constant 1 : index
    %c0_22 = arith.constant 0 : index
    %10 = vector.load %arg6[%c0_20, %c1_21, %c0_22] : memref<18x18x4xf32, #tpu.memory_space<vmem>>, vector<18x16x4xf32>
    %c0_23 = arith.constant 0 : index
    %c2 = arith.constant 2 : index
    %c0_24 = arith.constant 0 : index
    %11 = vector.load %arg6[%c0_23, %c2, %c0_24] : memref<18x18x4xf32, #tpu.memory_space<vmem>>, vector<18x16x4xf32>
    %12 = tpu.concatenate %9, %10, %11 in 2 : vector<18x16x4xf32>, vector<18x16x4xf32>, vector<18x16x4xf32> -> vector<18x16x12xf32>
    %13 = vector.extract_strided_slice %12 {offsets = [0, 0, 0], sizes = [16, 16, 12], strides = [1, 1, 1]} : vector<18x16x12xf32> to vector<16x16x12xf32>
    %14 = vector.shape_cast %13 : vector<16x16x12xf32> to vector<256x12xf32>
    %c0_25 = arith.constant 0 : index
    %c0_26 = arith.constant 0 : index
    %c0_27 = arith.constant 0 : index
    %15 = vector.load %arg3[%c0_25, %c0_26, %c0_27] : memref<3x12x8xf32, #tpu.memory_space<vmem>>, vector<1x12x8xf32>
    %16 = vector.shape_cast %15 : vector<1x12x8xf32> to vector<12x8xf32>
    %cst_28 = arith.constant dense<0.000000e+00> : vector<256x8xf32>
    %17 = tpu.matmul %14, %16, %cst_28 {dimension_numbers = #tpu.dot_dimension_numbers<[1], [0], [0], [1], [0, 0, 1, 1], [], []>} : vector<256x12xf32>, vector<12x8xf32>, vector<256x8xf32> -> vector<256x8xf32>
    %18 = vector.extract_strided_slice %12 {offsets = [1, 0, 0], sizes = [16, 16, 12], strides = [1, 1, 1]} : vector<18x16x12xf32> to vector<16x16x12xf32>
    %19 = vector.shape_cast %18 : vector<16x16x12xf32> to vector<256x12xf32>
    %c1_29 = arith.constant 1 : index
    %c0_30 = arith.constant 0 : index
    %c0_31 = arith.constant 0 : index
    %20 = vector.load %arg3[%c1_29, %c0_30, %c0_31] : memref<3x12x8xf32, #tpu.memory_space<vmem>>, vector<1x12x8xf32>
    %21 = vector.shape_cast %20 : vector<1x12x8xf32> to vector<12x8xf32>
    %cst_32 = arith.constant dense<0.000000e+00> : vector<256x8xf32>
    %22 = tpu.matmul %19, %21, %cst_32 {dimension_numbers = #tpu.dot_dimension_numbers<[1], [0], [0], [1], [0, 0, 1, 1], [], []>} : vector<256x12xf32>, vector<12x8xf32>, vector<256x8xf32> -> vector<256x8xf32>
    %23 = arith.addf %17, %22 : vector<256x8xf32>
    %24 = vector.extract_strided_slice %12 {offsets = [2, 0, 0], sizes = [16, 16, 12], strides = [1, 1, 1]} : vector<18x16x12xf32> to vector<16x16x12xf32>
    %25 = vector.shape_cast %24 : vector<16x16x12xf32> to vector<256x12xf32>
    %c2_33 = arith.constant 2 : index
    %c0_34 = arith.constant 0 : index
    %c0_35 = arith.constant 0 : index
    %26 = vector.load %arg3[%c2_33, %c0_34, %c0_35] : memref<3x12x8xf32, #tpu.memory_space<vmem>>, vector<1x12x8xf32>
    %27 = vector.shape_cast %26 : vector<1x12x8xf32> to vector<12x8xf32>
    %cst_36 = arith.constant dense<0.000000e+00> : vector<256x8xf32>
    %28 = tpu.matmul %25, %27, %cst_36 {dimension_numbers = #tpu.dot_dimension_numbers<[1], [0], [0], [1], [0, 0, 1, 1], [], []>} : vector<256x12xf32>, vector<12x8xf32>, vector<256x8xf32> -> vector<256x8xf32>
    %29 = arith.addf %23, %28 : vector<256x8xf32>
    %c0_37 = arith.constant 0 : index
    %c0_38 = arith.constant 0 : index
    %30 = vector.load %arg4[%c0_37, %c0_38] : memref<1x8xf32, #tpu.memory_space<vmem>>, vector<1x8xf32>
    %31 = vector.broadcast %30 : vector<1x8xf32> to vector<256x8xf32>
    %32 = arith.addf %29, %31 : vector<256x8xf32>
    %cst_39 = arith.constant 0.000000e+00 : f32
    %33 = vector.broadcast %cst_39 : f32 to vector<256x8xf32>
    %34 = arith.minimumf %32, %33 : vector<256x8xf32>
    %cst_40 = arith.constant 0.000000e+00 : f32
    %35 = vector.broadcast %cst_40 : f32 to vector<256x8xf32>
    %36 = arith.cmpf ogt, %32, %35 : vector<256x8xf32>
    %37 = math.exp %34 : vector<256x8xf32>
    %cst_41 = arith.constant 1.000000e+00 : f32
    %38 = vector.broadcast %cst_41 : f32 to vector<256x8xf32>
    %39 = arith.subf %37, %38 : vector<256x8xf32>
    %40 = arith.select %36, %32, %39 : vector<256x8xi1>, vector<256x8xf32>
    %c0_42 = arith.constant 0 : index
    %c0_43 = arith.constant 0 : index
    %c0_44 = arith.constant 0 : index
    %41 = vector.load %arg5[%c0_42, %c0_43, %c0_44] : memref<1x256x8xf32, #tpu.memory_space<vmem>>, vector<1x256x8xf32>
    %42 = vector.shape_cast %41 : vector<1x256x8xf32> to vector<256x8xf32>
    %43 = vector.shape_cast %40 : vector<256x8xf32> to vector<1x256x8xf32>
    tpu.vector_store %arg5[%c0_42, %c0_43, %c0_44], %43 {strides = array<i32>} : memref<1x256x8xf32, #tpu.memory_space<vmem>>, vector<1x256x8xf32>,
    return
  }
  func.func @transform_0(%arg0: i32, %arg1: i32) -> (i32, i32, i32, i32) {
    %c0_i32 = arith.constant 0 : i32
    %c0_i32_0 = arith.constant 0 : i32
    %c0_i32_1 = arith.constant 0 : i32
    %c0_i32_2 = arith.constant 0 : i32
    return %arg0, %c0_i32, %c0_i32_0, %c0_i32_1 : i32, i32, i32, i32
  }
  func.func @transform_1(%arg0: i32, %arg1: i32) -> (i32, i32, i32) {
    %c0_i32 = arith.constant 0 : i32
    %c0_i32_0 = arith.constant 0 : i32
    %c0_i32_1 = arith.constant 0 : i32
    %c0_i32_2 = arith.constant 0 : i32
    return %c0_i32, %c0_i32_0, %c0_i32_1 : i32, i32, i32
  }
  func.func @transform_2(%arg0: i32, %arg1: i32) -> (i32, i32) {
    %c0_i32 = arith.constant 0 : i32
    %c0_i32_0 = arith.constant 0 : i32
    %c0_i32_1 = arith.constant 0 : i32
    return %c0_i32, %c0_i32_0 : i32, i32
  }
  func.func @transform_3(%arg0: i32, %arg1: i32) -> (i32, i32, i32) {
    %c0_i32 = arith.constant 0 : i32
    %c0_i32_0 = arith.constant 0 : i32
    return %arg0, %arg1, %c0_i32 : i32, i32, i32
  }
}

</mosaic_0001>

<llo_original>
// kernel: tpu_custom_call.1
$region0: #{tpu_custom_call.1}
  #allocation0 [shape = 'u32[]', space=smem, size = 0x4, offset = 0x4, fixed_abs, tag = 'smem constant byte address 0x4 - core index']
  #allocation1 [shape = 'u32[72,128]{1,0:T(1,128)}', space=vmem, size = 0x9000, scoped, tag = 'internal scratch']
  #allocation2 [shape = 'f32[18,18,4]{2,1,0:T(8,128)}', space=vmem, size = 0x36000, scoped, tag = 'scratch operand']
  %s0 = inlined_call_operand.vmem [shape: f32[2,16,16,4], index: 0, kind: input, shape index: {}]
  %s1 = inlined_call_operand.vmem [shape: f32[3,12,8], index: 1, kind: input, shape index: {}]
  %s2 = inlined_call_operand.vmem [shape: f32[1,8], index: 2, kind: input, shape index: {}]
  %s3 = inlined_call_operand.vmem [shape: f32[2,256,8], index: 3, kind: output, shape index: {}]
  %s4 = sld [smem:[#allocation0]]
  $region45: #{tpu_custom_call.1} parent=0
    _
  %s6 = ssub.s32 1, %s4
  %s7 = scalar_select 0, %s6, %s4
  loop: start=0, step=1, limit=4
  $region2: #{tpu_custom_call.1} parent=0 // loop_pre_header
    _
  $region3: #{tpu_custom_call.1} parent=0 // loop_header
    %s9 = sphi 0, %s13
    %p10 = scmp.ge.s32.totalorder %s9, 4
    %s16 = sphi 0, %s28
    %s17 = sphi 0, %s24
    %s18 = sphi 0, %s16
    %s19 = sphi 0, %s17
    %s20 = sphi 0, %s18
    %s21 = sphi 0, %s19
    %s31 = sphi 0, %s33
    %s34 = sphi 0, %s31
    %s35 = sphi 0, %s34
    %s51 = sphi 0, %s35
    %s55 = sphi 0, %s55
    %s57 = sphi 0, %s55
    %s58 = sphi 0, %s57
    %s72 = sphi 0, %s58
    %s76 = sphi 0, %s76
    %s78 = sphi 0, %s76
    %s79 = sphi 0, %s78
    %s93 = sphi 0, %s79
    %s101 = sphi 0, %s103
    %s104 = sphi 0, %s101
    %s105 = sphi 0, %s104
    %s121 = sphi 0, %s105
  $region4: #{tpu_custom_call.1} parent=0 // loop_header_branch
    %12 = sbr.rel (%p10) target = $region8
  $region5: #{tpu_custom_call.1} parent=0 // loop_body
    %s14 = ssub.s32 %s9, 1
    %s15 = ssub.s32 %s9, 2
    %s22 = sadd.s32 1, %s17
    %p23 = scmp.ge.s32.totalorder %s22, 1
    %s24 = scalar_select %p23, 0, %s22
    %s25 = sadd.s32 1, %s16
    %s26 = scalar_select %p23, %s25, %s16
    %p27 = scmp.ge.s32.totalorder %s26, 2
    %s28 = scalar_select %p27, 0, %s26
    %s29 = ssub.s32 %s16, %s28
    %p30 = scmp.eq.s32.totalorder %s29, 0
    %s32 = sadd.s32 %s31, 1
    %s33 = scalar_select %p30, %s31, %s32
    %p36 = pneg %p30
    %p37 = scmp.eq.s32.totalorder %s9, 1
    %p38 = por %p36, %p37
    %p39 = scmp.ne.s32.totalorder %s31, %s34
    %p40 = scmp.eq.s32.totalorder %s9, 0
    %p41 = por %p39, %p40
    %p42 = scmp.ne.s32.totalorder %s31, %s34
    %p43 = scmp.eq.s32.totalorder %s14, 1
    %p44 = por %p42, %p43
    %p45 = scmp.ne.s32.totalorder %s34, %s35
    %p46 = scmp.eq.s32.totalorder %s14, 0
    %p47 = por %p45, %p46
    %p48 = scmp.ne.s32.totalorder %s34, %s35
    %p49 = scmp.eq.s32.totalorder %s15, 1
    %p50 = por %p48, %p49
    %p52 = scmp.ne.s32.totalorder %s35, %s51
    %p53 = scmp.eq.s32.totalorder %s15, 0
    %p54 = por %p52, %p53
    %s56 = sadd.s32 %s55, 1
    %p59 = scmp.eq.s32.totalorder %s9, 1
    %p60 = scmp.ne.s32.totalorder %s55, %s57
    %p61 = scmp.eq.s32.totalorder %s9, 0
    %p62 = por %p60, %p61
    %p63 = scmp.ne.s32.totalorder %s55, %s57
    %p64 = scmp.eq.s32.totalorder %s14, 1
    %p65 = por %p63, %p64
    %p66 = scmp.ne.s32.totalorder %s57, %s58
    %p67 = scmp.eq.s32.totalorder %s14, 0
    %p68 = por %p66, %p67
    %p69 = scmp.ne.s32.totalorder %s57, %s58
    %p70 = scmp.eq.s32.totalorder %s15, 1
    %p71 = por %p69, %p70
    %p73 = scmp.ne.s32.totalorder %s58, %s72
    %p74 = scmp.eq.s32.totalorder %s15, 0
    %p75 = por %p73, %p74
    %s77 = sadd.s32 %s76, 1
    %p80 = scmp.eq.s32.totalorder %s9, 1
    %p81 = scmp.ne.s32.totalorder %s76, %s78
    %p82 = scmp.eq.s32.totalorder %s9, 0
    %p83 = por %p81, %p82
    %p84 = scmp.ne.s32.totalorder %s76, %s78
    %p85 = scmp.eq.s32.totalorder %s14, 1
    %p86 = por %p84, %p85
    %p87 = scmp.ne.s32.totalorder %s78, %s79
    %p88 = scmp.eq.s32.totalorder %s14, 0
    %p89 = por %p87, %p88
    %p90 = scmp.ne.s32.totalorder %s78, %s79
    %p91 = scmp.eq.s32.totalorder %s15, 1
    %p92 = por %p90, %p91
    %p94 = scmp.ne.s32.totalorder %s79, %s93
    %p95 = scmp.eq.s32.totalorder %s15, 0
    %p96 = por %p94, %p95
    %s97 = ssub.s32 %s16, %s28
    %s98 = ssub.s32 %s17, %s24
    %s99 = sor.u32 %s97, %s98
    %p100 = scmp.eq.s32.totalorder %s99, 0
    %s102 = sadd.s32 %s101, 1
    %s103 = scalar_select %p100, %s101, %s102
    %p106 = pneg %p100
    %p107 = scmp.eq.s32.totalorder %s9, 1
    %p108 = por %p106, %p107
    %p109 = scmp.ne.s32.totalorder %s101, %s104
    %p110 = scmp.eq.s32.totalorder %s9, 0
    %p111 = por %p109, %p110
    %p112 = scmp.ne.s32.totalorder %s101, %s104
    %p113 = scmp.eq.s32.totalorder %s14, 1
    %p114 = por %p112, %p113
    %p115 = scmp.ne.s32.totalorder %s104, %s105
    %p116 = scmp.eq.s32.totalorder %s14, 0
    %p117 = por %p115, %p116
    %p118 = scmp.ne.s32.totalorder %s104, %s105
    %p119 = scmp.eq.s32.totalorder %s15, 1
    %p120 = por %p118, %p119
    %p122 = scmp.ne.s32.totalorder %s105, %s121
    %p123 = scmp.eq.s32.totalorder %s15, 0
    %p124 = por %p122, %p123
    %p125 = scmp.le.s32.totalorder 1, %s9
    %p126 = scmp.lt.s32.totalorder %s9, 3
    %p127 = pnand %p125, %p126
    %p128 = pneg %p127
    // Predicated region
    $region9: #{tpu_custom_call.1} parent=5 // pred_check
      _
    $region10: #{tpu_custom_call.1} parent=5 // pred_check_branch
      %130 = sbr.rel (%p127) target = $region12
    $region11: #{tpu_custom_call.1} parent=5 // pred_region
      %s131 = ssub.s32 %s9, 1
      // Predicated region
      $region13: #{tpu_custom_call.1} parent=11 // pred_check
        %p132 = pneg %p68
      $region14: #{tpu_custom_call.1} parent=11 // pred_check_branch
        %134 = sbr.rel (%p132) target = $region16
      $region15: #{tpu_custom_call.1} parent=11 // pred_region
        _
      $region16: #{tpu_custom_call.1} parent=11 // pred_fallthru
        _
      // Predicated region
      $region17: #{tpu_custom_call.1} parent=11 // pred_check
        %p135 = pneg %p89
      $region18: #{tpu_custom_call.1} parent=11 // pred_check_branch
        %137 = sbr.rel (%p135) target = $region20
      $region19: #{tpu_custom_call.1} parent=11 // pred_region
        _
      $region20: #{tpu_custom_call.1} parent=11 // pred_fallthru
        _
    $region12: #{tpu_custom_call.1} parent=5 // pred_fallthru
      _
    %p138 = scmp.lt.s32.totalorder %s9, 2
    // Predicated region
    $region21: #{tpu_custom_call.1} parent=5 // pred_check
      %p139 = pneg %p138
    $region22: #{tpu_custom_call.1} parent=5 // pred_check_branch
      %141 = sbr.rel (%p139) target = $region24
    $region23: #{tpu_custom_call.1} parent=5 // pred_region
      // Predicated region
      $region25: #{tpu_custom_call.1} parent=23 // pred_check
        %p142 = pneg %p41
      $region26: #{tpu_custom_call.1} parent=23 // pred_check_branch
        %144 = sbr.rel (%p142) target = $region28
      $region27: #{tpu_custom_call.1} parent=23 // pred_region
        %p145 = scmp.lt.s32.totalorder %s16, 1
        %s146 = scalar_select %p145, %s16, 1
        %s147 = smul.addr %s146, 32
        %s148 = smul.addr %s147, 8
        %s149 = scalar_lea.vmem %s0, %s148
      $region28: #{tpu_custom_call.1} parent=23 // pred_fallthru
        _
    $region24: #{tpu_custom_call.1} parent=5 // pred_fallthru
      _
    %p150 = scmp.le.s32.totalorder 1, %s9
    %p151 = scmp.lt.s32.totalorder %s9, 3
    %p152 = pnand %p150, %p151
    %p153 = pneg %p152
    // Predicated region
    $region29: #{tpu_custom_call.1} parent=5 // pred_check
      _
    $region30: #{tpu_custom_call.1} parent=5 // pred_check_branch
      %155 = sbr.rel (%p152) target = $region32
    $region31: #{tpu_custom_call.1} parent=5 // pred_region
      %s156 = ssub.s32 %s9, 1
      %p157 = scmp.lt.s32.totalorder %s18, 1
      %s158 = scalar_select %p157, %s18, 1
      %s159 = smul.addr %s158, 32
      %s160 = smul.addr %s159, 8
      %s161 = scalar_lea.vmem %s0, %s160
      %p162 = pneg %p47
      %p163 = pneg %p44
      %p164 = pneg %p68
      %p165 = pneg %p65
      %p166 = pneg %p89
      %p167 = pneg %p86
      %p168 = pneg %p117
      %p169 = pneg %p114
      %s170 = smul.u32 32, %s19
      %p171 = scmp.lt.s32.totalorder %s18, 1
      %s172 = scalar_select %p171, %s18, 1
      %p173 = scmp.lt.s32.totalorder %s170, 31
      %s174 = scalar_select %p173, %s170, 31
      %s175 = smul.addr %s172, 32
      %s176 = sadd.s32 %s174, %s175
      %s177 = smul.addr %s176, 8
      %s178 = scalar_lea.vmem %s3, %s177
      %p179 = scmp.lt.s32.totalorder %s18, 1
      %s180 = scalar_select %p179, %s18, 1
      %s181 = smul.addr %s180, 32
      %s182 = smul.addr %s181, 8
      %s183 = scalar_lea.vmem %s0, %s182
      %s184 = smul.u32 32, %s19
      %p185 = scmp.lt.s32.totalorder %s18, 1
      %s186 = scalar_select %p185, %s18, 1
      %p187 = scmp.lt.s32.totalorder %s184, 31
      %s188 = scalar_select %p187, %s184, 31
      %s189 = smul.addr %s186, 32
      %s190 = sadd.s32 %s188, %s189
      %s191 = smul.addr %s190, 8
      %s192 = scalar_lea.vmem %s3, %s191
      %s193 = smul.u32 32, %s19
      %vm194 = vcmask 24576
      %195 = vst.msk [vmem:[#allocation2] sm:$0x1] %vm194, 0.0
      %196 = vst.msk [vmem:[#allocation2 + $0x18] sm:$0x1] %vm194, 0.0
      %197 = vst.msk [vmem:[#allocation2 + $0x30] sm:$0x1] %vm194, 0.0
      %198 = vst.msk [vmem:[#allocation2 + $0x48] sm:$0x1] %vm194, 0.0
      %199 = vst.msk [vmem:[#allocation2 + $0x60] sm:$0x1] %vm194, 0.0
      %200 = vst.msk [vmem:[#allocation2 + $0x78] sm:$0x1] %vm194, 0.0
      %201 = vst.msk [vmem:[#allocation2 + $0x90] sm:$0x1] %vm194, 0.0
      %202 = vst.msk [vmem:[#allocation2 + $0xa8] sm:$0x1] %vm194, 0.0
      %203 = vst.msk [vmem:[#allocation2 + $0xc0] sm:$0x1] %vm194, 0.0
      %204 = vst.msk [vmem:[#allocation2 + $0xd8] sm:$0x1] %vm194, 0.0
      %205 = vst.msk [vmem:[#allocation2 + $0xf0] sm:$0x1] %vm194, 0.0
      %206 = vst.msk [vmem:[#allocation2 + $0x108] sm:$0x1] %vm194, 0.0
      %207 = vst.msk [vmem:[#allocation2 + $0x120] sm:$0x1] %vm194, 0.0
      %208 = vst.msk [vmem:[#allocation2 + $0x138] sm:$0x1] %vm194, 0.0
      %209 = vst.msk [vmem:[#allocation2 + $0x150] sm:$0x1] %vm194, 0.0
      %210 = vst.msk [vmem:[#allocation2 + $0x168] sm:$0x1] %vm194, 0.0
      %211 = vst.msk [vmem:[#allocation2 + $0x180] sm:$0x1] %vm194, 0.0
      %212 = vst.msk [vmem:[#allocation2 + $0x198] sm:$0x1] %vm194, 0.0
      %213 = vst.msk [vmem:[#allocation2 + $0x11] sm:$0x1] %vm194, 0.0
      %214 = vst.msk [vmem:[#allocation2 + $0x29] sm:$0x1] %vm194, 0.0
      %215 = vst.msk [vmem:[#allocation2 + $0x41] sm:$0x1] %vm194, 0.0
      %216 = vst.msk [vmem:[#allocation2 + $0x59] sm:$0x1] %vm194, 0.0
      %217 = vst.msk [vmem:[#allocation2 + $0x71] sm:$0x1] %vm194, 0.0
      %218 = vst.msk [vmem:[#allocation2 + $0x89] sm:$0x1] %vm194, 0.0
      %219 = vst.msk [vmem:[#allocation2 + $0xa1] sm:$0x1] %vm194, 0.0
      %220 = vst.msk [vmem:[#allocation2 + $0xb9] sm:$0x1] %vm194, 0.0
      %221 = vst.msk [vmem:[#allocation2 + $0xd1] sm:$0x1] %vm194, 0.0
      %222 = vst.msk [vmem:[#allocation2 + $0xe9] sm:$0x1] %vm194, 0.0
      %223 = vst.msk [vmem:[#allocation2 + $0x101] sm:$0x1] %vm194, 0.0
      %224 = vst.msk [vmem:[#allocation2 + $0x119] sm:$0x1] %vm194, 0.0
      %225 = vst.msk [vmem:[#allocation2 + $0x131] sm:$0x1] %vm194, 0.0
      %226 = vst.msk [vmem:[#allocation2 + $0x149] sm:$0x1] %vm194, 0.0
      %227 = vst.msk [vmem:[#allocation2 + $0x161] sm:$0x1] %vm194, 0.0
      %228 = vst.msk [vmem:[#allocation2 + $0x179] sm:$0x1] %vm194, 0.0
      %229 = vst.msk [vmem:[#allocation2 + $0x191] sm:$0x1] %vm194, 0.0
      %230 = vst.msk [vmem:[#allocation2 + $0x1a9] sm:$0x1] %vm194, 0.0
      %vm231 = vcmask 31744
      %232 = vst.msk [vmem:[#allocation2] sm:$0xff] %vm231, 0.0
      %233 = vst.msk [vmem:[#allocation2 + $0x8] sm:$0xff] %vm231, 0.0
      %vm234 = vcmask 25600
      %235 = vst.msk [vmem:[#allocation2 + $0x10] sm:$0x3] %vm234, 0.0
      %s236 = scalar_lea.vmem [#allocation2], 408
      %237 = vst.msk [vmem:[%s236] sm:$0xff] %vm231, 0.0
      %238 = vst.msk [vmem:[%s236 + $0x8] sm:$0xff] %vm231, 0.0
      %239 = vst.msk [vmem:[%s236 + $0x10] sm:$0x3] %vm234, 0.0
      %v240 = vld [vmem:[%s183] sm:$0xff]
      %v241 = vld [vmem:[%s183 + $0x8] sm:$0xff]
      %v242 = vld [vmem:[%s183 + $0x10] sm:$0xff]
      %v243 = vld [vmem:[%s183 + $0x18] sm:$0xff]
      %v244 = vld [vmem:[%s183 + $0x20] sm:$0xff]
      %v245 = vld [vmem:[%s183 + $0x28] sm:$0xff]
      %v246 = vld [vmem:[%s183 + $0x30] sm:$0xff]
      %v247 = vld [vmem:[%s183 + $0x38] sm:$0xff]
      %v248 = vld [vmem:[%s183 + $0x40] sm:$0xff]
      %v249 = vld [vmem:[%s183 + $0x48] sm:$0xff]
      %v250 = vld [vmem:[%s183 + $0x50] sm:$0xff]
      %v251 = vld [vmem:[%s183 + $0x58] sm:$0xff]
      %v252 = vld [vmem:[%s183 + $0x60] sm:$0xff]
      %v253 = vld [vmem:[%s183 + $0x68] sm:$0xff]
      %v254 = vld [vmem:[%s183 + $0x70] sm:$0xff]
      %v255 = vld [vmem:[%s183 + $0x78] sm:$0xff]
      %v256 = vld [vmem:[%s183 + $0x80] sm:$0xff]
      %v257 = vld [vmem:[%s183 + $0x88] sm:$0xff]
      %v258 = vld [vmem:[%s183 + $0x90] sm:$0xff]
      %v259 = vld [vmem:[%s183 + $0x98] sm:$0xff]
      %v260 = vld [vmem:[%s183 + $0xa0] sm:$0xff]
      %v261 = vld [vmem:[%s183 + $0xa8] sm:$0xff]
      %v262 = vld [vmem:[%s183 + $0xb0] sm:$0xff]
      %v263 = vld [vmem:[%s183 + $0xb8] sm:$0xff]
      %v264 = vld [vmem:[%s183 + $0xc0] sm:$0xff]
      %v265 = vld [vmem:[%s183 + $0xc8] sm:$0xff]
      %v266 = vld [vmem:[%s183 + $0xd0] sm:$0xff]
      %v267 = vld [vmem:[%s183 + $0xd8] sm:$0xff]
      %v268 = vld [vmem:[%s183 + $0xe0] sm:$0xff]
      %v269 = vld [vmem:[%s183 + $0xe8] sm:$0xff]
      %v270 = vld [vmem:[%s183 + $0xf0] sm:$0xff]
      %v271 = vld [vmem:[%s183 + $0xf8] sm:$0xff]
      %s272 = scalar_lea.vmem [#allocation2], 24
      %273 = vst.msk [vmem:[%s272 + $0x1] sm:$0xff] %vm231, %v240
      %274 = vst.msk [vmem:[%s272 + $0x9] sm:$0xff] %vm231, %v241
      %275 = vst.msk [vmem:[%s272 + $0x19] sm:$0xff] %vm231, %v242
      %276 = vst.msk [vmem:[%s272 + $0x21] sm:$0xff] %vm231, %v243
      %277 = vst.msk [vmem:[%s272 + $0x31] sm:$0xff] %vm231, %v244
      %278 = vst.msk [vmem:[%s272 + $0x39] sm:$0xff] %vm231, %v245
      %279 = vst.msk [vmem:[%s272 + $0x49] sm:$0xff] %vm231, %v246
      %280 = vst.msk [vmem:[%s272 + $0x51] sm:$0xff] %vm231, %v247
      %281 = vst.msk [vmem:[%s272 + $0x61] sm:$0xff] %vm231, %v248
      %282 = vst.msk [vmem:[%s272 + $0x69] sm:$0xff] %vm231, %v249
      %283 = vst.msk [vmem:[%s272 + $0x79] sm:$0xff] %vm231, %v250
      %284 = vst.msk [vmem:[%s272 + $0x81] sm:$0xff] %vm231, %v251
      %285 = vst.msk [vmem:[%s272 + $0x91] sm:$0xff] %vm231, %v252
      %286 = vst.msk [vmem:[%s272 + $0x99] sm:$0xff] %vm231, %v253
      %287 = vst.msk [vmem:[%s272 + $0xa9] sm:$0xff] %vm231, %v254
      %288 = vst.msk [vmem:[%s272 + $0xb1] sm:$0xff] %vm231, %v255
      %289 = vst.msk [vmem:[%s272 + $0xc1] sm:$0xff] %vm231, %v256
      %290 = vst.msk [vmem:[%s272 + $0xc9] sm:$0xff] %vm231, %v257
      %291 = vst.msk [vmem:[%s272 + $0xd9] sm:$0xff] %vm231, %v258
      %292 = vst.msk [vmem:[%s272 + $0xe1] sm:$0xff] %vm231, %v259
      %293 = vst.msk [vmem:[%s272 + $0xf1] sm:$0xff] %vm231, %v260
      %294 = vst.msk [vmem:[%s272 + $0xf9] sm:$0xff] %vm231, %v261
      %295 = vst.msk [vmem:[%s272 + $0x109] sm:$0xff] %vm231, %v262
      %296 = vst.msk [vmem:[%s272 + $0x111] sm:$0xff] %vm231, %v263
      %297 = vst.msk [vmem:[%s272 + $0x121] sm:$0xff] %vm231, %v264
      %298 = vst.msk [vmem:[%s272 + $0x129] sm:$0xff] %vm231, %v265
      %299 = vst.msk [vmem:[%s272 + $0x139] sm:$0xff] %vm231, %v266
      %300 = vst.msk [vmem:[%s272 + $0x141] sm:$0xff] %vm231, %v267
      %301 = vst.msk [vmem:[%s272 + $0x151] sm:$0xff] %vm231, %v268
      %302 = vst.msk [vmem:[%s272 + $0x159] sm:$0xff] %vm231, %v269
      %303 = vst.msk [vmem:[%s272 + $0x169] sm:$0xff] %vm231, %v270
      %304 = vst.msk [vmem:[%s272 + $0x171] sm:$0xff] %vm231, %v271
      %v305 = vld [vmem:[#allocation2] sm:$0xff]
      %v306 = vld [vmem:[#allocation2 + $0x8] sm:$0xff]
      %v307 = vld [vmem:[#allocation2 + $0x18] sm:$0xff]
      %v308 = vld [vmem:[#allocation2 + $0x20] sm:$0xff]
      %v309 = vld [vmem:[#allocation2 + $0x30] sm:$0xff]
      %v310 = vld [vmem:[#allocation2 + $0x38] sm:$0xff]
      %v311 = vld [vmem:[#allocation2 + $0x48] sm:$0xff]
      %v312 = vld [vmem:[#allocation2 + $0x50] sm:$0xff]
      %v313 = vld [vmem:[#allocation2 + $0x60] sm:$0xff]
      %v314 = vld [vmem:[#allocation2 + $0x68] sm:$0xff]
      %v315 = vld [vmem:[#allocation2 + $0x78] sm:$0xff]
      %v316 = vld [vmem:[#allocation2 + $0x80] sm:$0xff]
      %v317 = vld [vmem:[#allocation2 + $0x90] sm:$0xff]
      %v318 = vld [vmem:[#allocation2 + $0x98] sm:$0xff]
      %v319 = vld [vmem:[#allocation2 + $0xa8] sm:$0xff]
      %v320 = vld [vmem:[#allocation2 + $0xb0] sm:$0xff]
      %v321 = vld [vmem:[#allocation2 + $0xc0] sm:$0xff]
      %v322 = vld [vmem:[#allocation2 + $0xc8] sm:$0xff]
      %v323 = vld [vmem:[#allocation2 + $0xd8] sm:$0xff]
      %v324 = vld [vmem:[#allocation2 + $0xe0] sm:$0xff]
      %v325 = vld [vmem:[#allocation2 + $0xf0] sm:$0xff]
      %v326 = vld [vmem:[#allocation2 + $0xf8] sm:$0xff]
      %v327 = vld [vmem:[#allocation2 + $0x108] sm:$0xff]
      %v328 = vld [vmem:[#allocation2 + $0x110] sm:$0xff]
      %v329 = vld [vmem:[#allocation2 + $0x120] sm:$0xff]
      %v330 = vld [vmem:[#allocation2 + $0x128] sm:$0xff]
      %v331 = vld [vmem:[#allocation2 + $0x138] sm:$0xff]
      %v332 = vld [vmem:[#allocation2 + $0x140] sm:$0xff]
      %v333 = vld [vmem:[#allocation2 + $0x150] sm:$0xff]
      %v334 = vld [vmem:[#allocation2 + $0x158] sm:$0xff]
      %v335 = vld [vmem:[#allocation2 + $0x168] sm:$0xff]
      %v336 = vld [vmem:[#allocation2 + $0x170] sm:$0xff]
      %v337 = vld [vmem:[#allocation2 + $0x180] sm:$0xff]
      %v338 = vld [vmem:[#allocation2 + $0x188] sm:$0xff]
      %v339 = vld [vmem:[#allocation2 + $0x198] sm:$0xff]
      %v340 = vld [vmem:[#allocation2 + $0x1a0] sm:$0xff]
      %v341 = vld [vmem:[#allocation2 + $0x1] sm:$0xff]
      %v342 = vld [vmem:[#allocation2 + $0x9] sm:$0xff]
      %v343 = vld [vmem:[#allocation2 + $0x19] sm:$0xff]
      %v344 = vld [vmem:[#allocation2 + $0x21] sm:$0xff]
      %v345 = vld [vmem:[#allocation2 + $0x31] sm:$0xff]
      %v346 = vld [vmem:[#allocation2 + $0x39] sm:$0xff]
      %v347 = vld [vmem:[#allocation2 + $0x49] sm:$0xff]
      %v348 = vld [vmem:[#allocation2 + $0x51] sm:$0xff]
      %v349 = vld [vmem:[#allocation2 + $0x61] sm:$0xff]
      %v350 = vld [vmem:[#allocation2 + $0x69] sm:$0xff]
      %v351 = vld [vmem:[#allocation2 + $0x79] sm:$0xff]
      %v352 = vld [vmem:[#allocation2 + $0x81] sm:$0xff]
      %v353 = vld [vmem:[#allocation2 + $0x91] sm:$0xff]
      %v354 = vld [vmem:[#allocation2 + $0x99] sm:$0xff]
      %v355 = vld [vmem:[#allocation2 + $0xa9] sm:$0xff]
      %v356 = vld [vmem:[#allocation2 + $0xb1] sm:$0xff]
      %v357 = vld [vmem:[#allocation2 + $0xc1] sm:$0xff]
      %v358 = vld [vmem:[#allocation2 + $0xc9] sm:$0xff]
      %v359 = vld [vmem:[#allocation2 + $0xd9] sm:$0xff]
      %v360 = vld [vmem:[#allocation2 + $0xe1] sm:$0xff]
      %v361 = vld [vmem:[#allocation2 + $0xf1] sm:$0xff]
      %v362 = vld [vmem:[#allocation2 + $0xf9] sm:$0xff]
      %v363 = vld [vmem:[#allocation2 + $0x109] sm:$0xff]
      %v364 = vld [vmem:[#allocation2 + $0x111] sm:$0xff]
      %v365 = vld [vmem:[#allocation2 + $0x121] sm:$0xff]
      %v366 = vld [vmem:[#allocation2 + $0x129] sm:$0xff]
      %v367 = vld [vmem:[#allocation2 + $0x139] sm:$0xff]
      %v368 = vld [vmem:[#allocation2 + $0x141] sm:$0xff]
      %v369 = vld [vmem:[#allocation2 + $0x151] sm:$0xff]
      %v370 = vld [vmem:[#allocation2 + $0x159] sm:$0xff]
      %v371 = vld [vmem:[#allocation2 + $0x169] sm:$0xff]
      %v372 = vld [vmem:[#allocation2 + $0x171] sm:$0xff]
      %v373 = vld [vmem:[#allocation2 + $0x181] sm:$0xff]
      %v374 = vld [vmem:[#allocation2 + $0x189] sm:$0xff]
      %v375 = vld [vmem:[#allocation2 + $0x199] sm:$0xff]
      %v376 = vld [vmem:[#allocation2 + $0x1a1] sm:$0xff]
      %v377 = vld [vmem:[#allocation2 + $0x2] sm:$0xff]
      %v378 = vld [vmem:[#allocation2 + $0xa] sm:$0xff]
      %v379 = vld [vmem:[#allocation2 + $0x1a] sm:$0xff]
      %v380 = vld [vmem:[#allocation2 + $0x22] sm:$0xff]
      %v381 = vld [vmem:[#allocation2 + $0x32] sm:$0xff]
      %v382 = vld [vmem:[#allocation2 + $0x3a] sm:$0xff]
      %v383 = vld [vmem:[#allocation2 + $0x4a] sm:$0xff]
      %v384 = vld [vmem:[#allocation2 + $0x52] sm:$0xff]
      %v385 = vld [vmem:[#allocation2 + $0x62] sm:$0xff]
      %v386 = vld [vmem:[#allocation2 + $0x6a] sm:$0xff]
      %v387 = vld [vmem:[#allocation2 + $0x7a] sm:$0xff]
      %v388 = vld [vmem:[#allocation2 + $0x82] sm:$0xff]
      %v389 = vld [vmem:[#allocation2 + $0x92] sm:$0xff]
      %v390 = vld [vmem:[#allocation2 + $0x9a] sm:$0xff]
      %v391 = vld [vmem:[#allocation2 + $0xaa] sm:$0xff]
      %v392 = vld [vmem:[#allocation2 + $0xb2] sm:$0xff]
      %v393 = vld [vmem:[#allocation2 + $0xc2] sm:$0xff]
      %v394 = vld [vmem:[#allocation2 + $0xca] sm:$0xff]
      %v395 = vld [vmem:[#allocation2 + $0xda] sm:$0xff]
      %v396 = vld [vmem:[#allocation2 + $0xe2] sm:$0xff]
      %v397 = vld [vmem:[#allocation2 + $0xf2] sm:$0xff]
      %v398 = vld [vmem:[#allocation2 + $0xfa] sm:$0xff]
      %v399 = vld [vmem:[#allocation2 + $0x10a] sm:$0xff]
      %v400 = vld [vmem:[#allocation2 + $0x112] sm:$0xff]
      %v401 = vld [vmem:[#allocation2 + $0x122] sm:$0xff]
      %v402 = vld [vmem:[#allocation2 + $0x12a] sm:$0xff]
      %v403 = vld [vmem:[#allocation2 + $0x13a] sm:$0xff]
      %v404 = vld [vmem:[#allocation2 + $0x142] sm:$0xff]
      %v405 = vld [vmem:[#allocation2 + $0x152] sm:$0xff]
      %v406 = vld [vmem:[#allocation2 + $0x15a] sm:$0xff]
      %v407 = vld [vmem:[#allocation2 + $0x16a] sm:$0xff]
      %v408 = vld [vmem:[#allocation2 + $0x172] sm:$0xff]
      %v409 = vld [vmem:[#allocation2 + $0x182] sm:$0xff]
      %v410 = vld [vmem:[#allocation2 + $0x18a] sm:$0xff]
      %v411 = vld [vmem:[#allocation2 + $0x19a] sm:$0xff]
      %v412 = vld [vmem:[#allocation2 + $0x1a2] sm:$0xff]
      %449 = vrot.lane.b32.xlu0 %v341, 4
      %v450 = vpop.permute.xlu0 %449
      %451 = vrot.lane.b32.xlu0 %v342, 4
      %v452 = vpop.permute.xlu0 %451
      %453 = vrot.lane.b32.xlu0 %v343, 4
      %v454 = vpop.permute.xlu0 %453
      %455 = vrot.lane.b32.xlu0 %v344, 4
      %v456 = vpop.permute.xlu0 %455
      %457 = vrot.lane.b32.xlu0 %v345, 4
      %v458 = vpop.permute.xlu0 %457
      %459 = vrot.lane.b32.xlu0 %v346, 4
      %v460 = vpop.permute.xlu0 %459
      %461 = vrot.lane.b32.xlu0 %v347, 4
      %v462 = vpop.permute.xlu0 %461
      %463 = vrot.lane.b32.xlu0 %v348, 4
      %v464 = vpop.permute.xlu0 %463
      %465 = vrot.lane.b32.xlu0 %v349, 4
      %v466 = vpop.permute.xlu0 %465
      %467 = vrot.lane.b32.xlu0 %v350, 4
      %v468 = vpop.permute.xlu0 %467
      %469 = vrot.lane.b32.xlu0 %v351, 4
      %v470 = vpop.permute.xlu0 %469
      %471 = vrot.lane.b32.xlu0 %v352, 4
      %v472 = vpop.permute.xlu0 %471
      %473 = vrot.lane.b32.xlu0 %v353, 4
      %v474 = vpop.permute.xlu0 %473
      %475 = vrot.lane.b32.xlu0 %v354, 4
      %v476 = vpop.permute.xlu0 %475
      %477 = vrot.lane.b32.xlu0 %v355, 4
      %v478 = vpop.permute.xlu0 %477
      %479 = vrot.lane.b32.xlu0 %v356, 4
      %v480 = vpop.permute.xlu0 %479
      %481 = vrot.lane.b32.xlu0 %v357, 4
      %v482 = vpop.permute.xlu0 %481
      %483 = vrot.lane.b32.xlu0 %v358, 4
      %v484 = vpop.permute.xlu0 %483
      %485 = vrot.lane.b32.xlu0 %v359, 4
      %v486 = vpop.permute.xlu0 %485
      %487 = vrot.lane.b32.xlu0 %v360, 4
      %v488 = vpop.permute.xlu0 %487
      %489 = vrot.lane.b32.xlu0 %v361, 4
      %v490 = vpop.permute.xlu0 %489
      %491 = vrot.lane.b32.xlu0 %v362, 4
      %v492 = vpop.permute.xlu0 %491
      %493 = vrot.lane.b32.xlu0 %v363, 4
      %v494 = vpop.permute.xlu0 %493
      %495 = vrot.lane.b32.xlu0 %v364, 4
      %v496 = vpop.permute.xlu0 %495
      %497 = vrot.lane.b32.xlu0 %v365, 4
      %v498 = vpop.permute.xlu0 %497
      %499 = vrot.lane.b32.xlu0 %v366, 4
      %v500 = vpop.permute.xlu0 %499
      %501 = vrot.lane.b32.xlu0 %v367, 4
      %v502 = vpop.permute.xlu0 %501
      %503 = vrot.lane.b32.xlu0 %v368, 4
      %v504 = vpop.permute.xlu0 %503
      %505 = vrot.lane.b32.xlu0 %v369, 4
      %v506 = vpop.permute.xlu0 %505
      %507 = vrot.lane.b32.xlu0 %v370, 4
      %v508 = vpop.permute.xlu0 %507
      %509 = vrot.lane.b32.xlu0 %v371, 4
      %v510 = vpop.permute.xlu0 %509
      %511 = vrot.lane.b32.xlu0 %v372, 4
      %v512 = vpop.permute.xlu0 %511
      %513 = vrot.lane.b32.xlu0 %v373, 4
      %v514 = vpop.permute.xlu0 %513
      %515 = vrot.lane.b32.xlu0 %v374, 4
      %v516 = vpop.permute.xlu0 %515
      %517 = vrot.lane.b32.xlu0 %v375, 4
      %v518 = vpop.permute.xlu0 %517
      %519 = vrot.lane.b32.xlu0 %v376, 4
      %v520 = vpop.permute.xlu0 %519
      %593 = vrot.lane.b32.xlu0 %v377, 8
      %v594 = vpop.permute.xlu0 %593
      %595 = vrot.lane.b32.xlu0 %v378, 8
      %v596 = vpop.permute.xlu0 %595
      %597 = vrot.lane.b32.xlu0 %v379, 8
      %v598 = vpop.permute.xlu0 %597
      %599 = vrot.lane.b32.xlu0 %v380, 8
      %v600 = vpop.permute.xlu0 %599
      %601 = vrot.lane.b32.xlu0 %v381, 8
      %v602 = vpop.permute.xlu0 %601
      %603 = vrot.lane.b32.xlu0 %v382, 8
      %v604 = vpop.permute.xlu0 %603
      %605 = vrot.lane.b32.xlu0 %v383, 8
      %v606 = vpop.permute.xlu0 %605
      %607 = vrot.lane.b32.xlu0 %v384, 8
      %v608 = vpop.permute.xlu0 %607
      %609 = vrot.lane.b32.xlu0 %v385, 8
      %v610 = vpop.permute.xlu0 %609
      %611 = vrot.lane.b32.xlu0 %v386, 8
      %v612 = vpop.permute.xlu0 %611
      %613 = vrot.lane.b32.xlu0 %v387, 8
      %v614 = vpop.permute.xlu0 %613
      %615 = vrot.lane.b32.xlu0 %v388, 8
      %v616 = vpop.permute.xlu0 %615
      %617 = vrot.lane.b32.xlu0 %v389, 8
      %v618 = vpop.permute.xlu0 %617
      %619 = vrot.lane.b32.xlu0 %v390, 8
      %v620 = vpop.permute.xlu0 %619
      %621 = vrot.lane.b32.xlu0 %v391, 8
      %v622 = vpop.permute.xlu0 %621
      %623 = vrot.lane.b32.xlu0 %v392, 8
      %v624 = vpop.permute.xlu0 %623
      %625 = vrot.lane.b32.xlu0 %v393, 8
      %v626 = vpop.permute.xlu0 %625
      %627 = vrot.lane.b32.xlu0 %v394, 8
      %v628 = vpop.permute.xlu0 %627
      %629 = vrot.lane.b32.xlu0 %v395, 8
      %v630 = vpop.permute.xlu0 %629
      %631 = vrot.lane.b32.xlu0 %v396, 8
      %v632 = vpop.permute.xlu0 %631
      %633 = vrot.lane.b32.xlu0 %v397, 8
      %v634 = vpop.permute.xlu0 %633
      %635 = vrot.lane.b32.xlu0 %v398, 8
      %v636 = vpop.permute.xlu0 %635
      %637 = vrot.lane.b32.xlu0 %v399, 8
      %v638 = vpop.permute.xlu0 %637
      %639 = vrot.lane.b32.xlu0 %v400, 8
      %v640 = vpop.permute.xlu0 %639
      %641 = vrot.lane.b32.xlu0 %v401, 8
      %v642 = vpop.permute.xlu0 %641
      %643 = vrot.lane.b32.xlu0 %v402, 8
      %v644 = vpop.permute.xlu0 %643
      %645 = vrot.lane.b32.xlu0 %v403, 8
      %v646 = vpop.permute.xlu0 %645
      %647 = vrot.lane.b32.xlu0 %v404, 8
      %v648 = vpop.permute.xlu0 %647
      %649 = vrot.lane.b32.xlu0 %v405, 8
      %v650 = vpop.permute.xlu0 %649
      %651 = vrot.lane.b32.xlu0 %v406, 8
      %v652 = vpop.permute.xlu0 %651
      %653 = vrot.lane.b32.xlu0 %v407, 8
      %v654 = vpop.permute.xlu0 %653
      %655 = vrot.lane.b32.xlu0 %v408, 8
      %v656 = vpop.permute.xlu0 %655
      %657 = vrot.lane.b32.xlu0 %v409, 8
      %v658 = vpop.permute.xlu0 %657
      %659 = vrot.lane.b32.xlu0 %v410, 8
      %v660 = vpop.permute.xlu0 %659
      %661 = vrot.lane.b32.xlu0 %v411, 8
      %v662 = vpop.permute.xlu0 %661
      %663 = vrot.lane.b32.xlu0 %v412, 8
      %v664 = vpop.permute.xlu0 %663
      %v701 = vsel %vm231, %v305, %v450
      %v702 = vsel %vm231, %v306, %v452
      %v703 = vsel %vm231, %v307, %v454
      %v704 = vsel %vm231, %v308, %v456
      %v705 = vsel %vm231, %v309, %v458
      %v706 = vsel %vm231, %v310, %v460
      %v707 = vsel %vm231, %v311, %v462
      %v708 = vsel %vm231, %v312, %v464
      %v709 = vsel %vm231, %v313, %v466
      %v710 = vsel %vm231, %v314, %v468
      %v711 = vsel %vm231, %v315, %v470
      %v712 = vsel %vm231, %v316, %v472
      %v713 = vsel %vm231, %v317, %v474
      %v714 = vsel %vm231, %v318, %v476
      %v715 = vsel %vm231, %v319, %v478
      %v716 = vsel %vm231, %v320, %v480
      %v717 = vsel %vm231, %v321, %v482
      %v718 = vsel %vm231, %v322, %v484
      %v719 = vsel %vm231, %v323, %v486
      %v720 = vsel %vm231, %v324, %v488
      %v721 = vsel %vm231, %v325, %v490
      %v722 = vsel %vm231, %v326, %v492
      %v723 = vsel %vm231, %v327, %v494
      %v724 = vsel %vm231, %v328, %v496
      %v725 = vsel %vm231, %v329, %v498
      %v726 = vsel %vm231, %v330, %v500
      %v727 = vsel %vm231, %v331, %v502
      %v728 = vsel %vm231, %v332, %v504
      %v729 = vsel %vm231, %v333, %v506
      %v730 = vsel %vm231, %v334, %v508
      %v731 = vsel %vm231, %v335, %v510
      %v732 = vsel %vm231, %v336, %v512
      %v733 = vsel %vm231, %v337, %v514
      %v734 = vsel %vm231, %v338, %v516
      %v735 = vsel %vm231, %v339, %v518
      %v736 = vsel %vm231, %v340, %v520
      %vm737 = vcmask 64512
      %v738 = vsel %vm737, %v701, %v594
      %v739 = vsel %vm737, %v702, %v596
      %v740 = vsel %vm737, %v703, %v598
      %v741 = vsel %vm737, %v704, %v600
      %v742 = vsel %vm737, %v705, %v602
      %v743 = vsel %vm737, %v706, %v604
      %v744 = vsel %vm737, %v707, %v606
      %v745 = vsel %vm737, %v708, %v608
      %v746 = vsel %vm737, %v709, %v610
      %v747 = vsel %vm737, %v710, %v612
      %v748 = vsel %vm737, %v711, %v614
      %v749 = vsel %vm737, %v712, %v616
      %v750 = vsel %vm737, %v713, %v618
      %v751 = vsel %vm737, %v714, %v620
      %v752 = vsel %vm737, %v715, %v622
      %v753 = vsel %vm737, %v716, %v624
      %v754 = vsel %vm737, %v717, %v626
      %v755 = vsel %vm737, %v718, %v628
      %v756 = vsel %vm737, %v719, %v630
      %v757 = vsel %vm737, %v720, %v632
      %v758 = vsel %vm737, %v721, %v634
      %v759 = vsel %vm737, %v722, %v636
      %v760 = vsel %vm737, %v723, %v638
      %v761 = vsel %vm737, %v724, %v640
      %v762 = vsel %vm737, %v725, %v642
      %v763 = vsel %vm737, %v726, %v644
      %v764 = vsel %vm737, %v727, %v646
      %v765 = vsel %vm737, %v728, %v648
      %v766 = vsel %vm737, %v729, %v650
      %v767 = vsel %vm737, %v730, %v652
      %v768 = vsel %vm737, %v731, %v654
      %v769 = vsel %vm737, %v732, %v656
      %v770 = vsel %vm737, %v733, %v658
      %v771 = vsel %vm737, %v734, %v660
      %v772 = vsel %vm737, %v735, %v662
      %v773 = vsel %vm737, %v736, %v664
      %v774 = vld [vmem:[%s1] sm:$0xff]
      %v775 = vld [vmem:[%s1 + $0x8] sm:$0xf]
      %s776 = scalar_lea.vmem %s1, 16
      %v777 = vld [vmem:[%s776] sm:$0xff]
      %v778 = vld [vmem:[%s776 + $0x8] sm:$0xf]
      %vm779 = vcmask 97280
      %v781 = vsel %vm779, %v740, 0
      %v784 = vsel %vm779, %v741, 0
      %v787 = vsel %vm779, %v742, 0
      %v790 = vsel %vm779, %v743, 0
      %v793 = vsel %vm779, %v744, 0
      %v796 = vsel %vm779, %v745, 0
      %v799 = vsel %vm779, %v746, 0
      %v802 = vsel %vm779, %v747, 0
      %v805 = vsel %vm779, %v748, 0
      %v808 = vsel %vm779, %v749, 0
      %v811 = vsel %vm779, %v750, 0
      %v814 = vsel %vm779, %v751, 0
      %v817 = vsel %vm779, %v752, 0
      %v820 = vsel %vm779, %v753, 0
      %v823 = vsel %vm779, %v754, 0
      %v826 = vsel %vm779, %v755, 0
      %v829 = vsel %vm779, %v756, 0
      %v832 = vsel %vm779, %v757, 0
      %v835 = vsel %vm779, %v758, 0
      %v838 = vsel %vm779, %v759, 0
      %v841 = vsel %vm779, %v760, 0
      %v844 = vsel %vm779, %v761, 0
      %v847 = vsel %vm779, %v762, 0
      %v850 = vsel %vm779, %v763, 0
      %v853 = vsel %vm779, %v764, 0
      %v856 = vsel %vm779, %v765, 0
      %v859 = vsel %vm779, %v766, 0
      %v862 = vsel %vm779, %v767, 0
      %v865 = vsel %vm779, %v768, 0
      %v868 = vsel %vm779, %v769, 0
      %v871 = vsel %vm779, %v770, 0
      %v874 = vsel %vm779, %v771, 0
      %vm876 = vcmask 1043456
      %v878 = vsel %vm876, %v778, 0
      %880 = vmatpush.msra.mxu0 0.0
      %881 = vmatpush.msra.mxu0 0.0
      %882 = vmatpush.msra.mxu0 0.0
      %883 = vmatpush.msra.mxu0 0.0
      %884 = vmatpush.msra.mxu0 0.0
      %885 = vmatpush.msra.mxu0 0.0
      %886 = vmatpush.msra.mxu0 0.0
      %887 = vmatpush.msra.mxu0 0.0
      %888 = vmatpush.msra.mxu0 0.0
      %889 = vmatpush.msra.mxu0 0.0
      %890 = vmatpush.msra.mxu0 0.0
      %891 = vmatpush.msra.mxu0 0.0
      %892 = vmatpush.msra.mxu0 0.0
      %893 = vmatpush.msra.mxu0 0.0
      %894 = vmatpush.msra.mxu0 %v878
      %895 = vmatpush.msra.mxu0 %v777
      %896 = vmatmul.f32.gmra.mxu0 %v781
      %v897 = vpop.f32.mrf.mxu0
      %v898 = vadd.f32 0.0, %v897
      %899 = vmatmul.f32.gmra.mxu0 %v784
      %v900 = vpop.f32.mrf.mxu0
      %v901 = vadd.f32 0.0, %v900
      %902 = vmatmul.f32.gmra.mxu0 %v787
      %v903 = vpop.f32.mrf.mxu0
      %v904 = vadd.f32 0.0, %v903
      %905 = vmatmul.f32.gmra.mxu0 %v790
      %v906 = vpop.f32.mrf.mxu0
      %v907 = vadd.f32 0.0, %v906
      %908 = vmatmul.f32.gmra.mxu0 %v793
      %v909 = vpop.f32.mrf.mxu0
      %v910 = vadd.f32 0.0, %v909
      %911 = vmatmul.f32.gmra.mxu0 %v796
      %v912 = vpop.f32.mrf.mxu0
      %v913 = vadd.f32 0.0, %v912
      %914 = vmatmul.f32.gmra.mxu0 %v799
      %v915 = vpop.f32.mrf.mxu0
      %v916 = vadd.f32 0.0, %v915
      %917 = vmatmul.f32.gmra.mxu0 %v802
      %v918 = vpop.f32.mrf.mxu0
      %v919 = vadd.f32 0.0, %v918
      %920 = vmatmul.f32.gmra.mxu0 %v805
      %v921 = vpop.f32.mrf.mxu0
      %v922 = vadd.f32 0.0, %v921
      %923 = vmatmul.f32.gmra.mxu0 %v808
      %v924 = vpop.f32.mrf.mxu0
      %v925 = vadd.f32 0.0, %v924
      %926 = vmatmul.f32.gmra.mxu0 %v811
      %v927 = vpop.f32.mrf.mxu0
      %v928 = vadd.f32 0.0, %v927
      %929 = vmatmul.f32.gmra.mxu0 %v814
      %v930 = vpop.f32.mrf.mxu0
      %v931 = vadd.f32 0.0, %v930
      %932 = vmatmul.f32.gmra.mxu0 %v817
      %v933 = vpop.f32.mrf.mxu0
      %v934 = vadd.f32 0.0, %v933
      %935 = vmatmul.f32.gmra.mxu0 %v820
      %v936 = vpop.f32.mrf.mxu0
      %v937 = vadd.f32 0.0, %v936
      %938 = vmatmul.f32.gmra.mxu0 %v823
      %v939 = vpop.f32.mrf.mxu0
      %v940 = vadd.f32 0.0, %v939
      %941 = vmatmul.f32.gmra.mxu0 %v826
      %v942 = vpop.f32.mrf.mxu0
      %v943 = vadd.f32 0.0, %v942
      %944 = vmatmul.f32.gmra.mxu0 %v829
      %v945 = vpop.f32.mrf.mxu0
      %v946 = vadd.f32 0.0, %v945
      %947 = vmatmul.f32.gmra.mxu0 %v832
      %v948 = vpop.f32.mrf.mxu0
      %v949 = vadd.f32 0.0, %v948
      %950 = vmatmul.f32.gmra.mxu0 %v835
      %v951 = vpop.f32.mrf.mxu0
      %v952 = vadd.f32 0.0, %v951
      %953 = vmatmul.f32.gmra.mxu0 %v838
      %v954 = vpop.f32.mrf.mxu0
      %v955 = vadd.f32 0.0, %v954
      %956 = vmatmul.f32.gmra.mxu0 %v841
      %v957 = vpop.f32.mrf.mxu0
      %v958 = vadd.f32 0.0, %v957
      %959 = vmatmul.f32.gmra.mxu0 %v844
      %v960 = vpop.f32.mrf.mxu0
      %v961 = vadd.f32 0.0, %v960
      %962 = vmatmul.f32.gmra.mxu0 %v847
      %v963 = vpop.f32.mrf.mxu0
      %v964 = vadd.f32 0.0, %v963
      %965 = vmatmul.f32.gmra.mxu0 %v850
      %v966 = vpop.f32.mrf.mxu0
      %v967 = vadd.f32 0.0, %v966
      %968 = vmatmul.f32.gmra.mxu0 %v853
      %v969 = vpop.f32.mrf.mxu0
      %v970 = vadd.f32 0.0, %v969
      %971 = vmatmul.f32.gmra.mxu0 %v856
      %v972 = vpop.f32.mrf.mxu0
      %v973 = vadd.f32 0.0, %v972
      %974 = vmatmul.f32.gmra.mxu0 %v859
      %v975 = vpop.f32.mrf.mxu0
      %v976 = vadd.f32 0.0, %v975
      %977 = vmatmul.f32.gmra.mxu0 %v862
      %v978 = vpop.f32.mrf.mxu0
      %v979 = vadd.f32 0.0, %v978
      %980 = vmatmul.f32.gmra.mxu0 %v865
      %v981 = vpop.f32.mrf.mxu0
      %v982 = vadd.f32 0.0, %v981
      %983 = vmatmul.f32.gmra.mxu0 %v868
      %v984 = vpop.f32.mrf.mxu0
      %v985 = vadd.f32 0.0, %v984
      %986 = vmatmul.f32.gmra.mxu0 %v871
      %v987 = vpop.f32.mrf.mxu0
      %v988 = vadd.f32 0.0, %v987
      %989 = vmatmul.f32.gmra.mxu0 %v874
      %v990 = vpop.f32.mrf.mxu0
      %v991 = vadd.f32 0.0, %v990
      %992 = vdwg.mxu0
      %v994 = vsel %vm779, %v738, 0
      %v997 = vsel %vm779, %v739, 0
      %v1000 = vsel %vm876, %v775, 0
      %1002 = vmatpush.msra.mxu0 0.0
      %1003 = vmatpush.msra.mxu0 0.0
      %1004 = vmatpush.msra.mxu0 0.0
      %1005 = vmatpush.msra.mxu0 0.0
      %1006 = vmatpush.msra.mxu0 0.0
      %1007 = vmatpush.msra.mxu0 0.0
      %1008 = vmatpush.msra.mxu0 0.0
      %1009 = vmatpush.msra.mxu0 0.0
      %1010 = vmatpush.msra.mxu0 0.0
      %1011 = vmatpush.msra.mxu0 0.0
      %1012 = vmatpush.msra.mxu0 0.0
      %1013 = vmatpush.msra.mxu0 0.0
      %1014 = vmatpush.msra.mxu0 0.0
      %1015 = vmatpush.msra.mxu0 0.0
      %1016 = vmatpush.msra.mxu0 %v1000
      %1017 = vmatpush.msra.mxu0 %v774
      %1018 = vmatmul.f32.gmra.mxu0 %v994
      %v1019 = vpop.f32.mrf.mxu0
      %v1020 = vadd.f32 %v898, %v1019
      %1021 = vmatmul.f32.gmra.mxu0 %v997
      %v1022 = vpop.f32.mrf.mxu0
      %v1023 = vadd.f32 %v901, %v1022
      %1024 = vmatmul.f32.gmra.mxu0 %v781
      %v1025 = vpop.f32.mrf.mxu0
      %v1026 = vadd.f32 %v904, %v1025
      %1027 = vmatmul.f32.gmra.mxu0 %v784
      %v1028 = vpop.f32.mrf.mxu0
      %v1029 = vadd.f32 %v907, %v1028
      %1030 = vmatmul.f32.gmra.mxu0 %v787
      %v1031 = vpop.f32.mrf.mxu0
      %v1032 = vadd.f32 %v910, %v1031
      %1033 = vmatmul.f32.gmra.mxu0 %v790
      %v1034 = vpop.f32.mrf.mxu0
      %v1035 = vadd.f32 %v913, %v1034
      %1036 = vmatmul.f32.gmra.mxu0 %v793
      %v1037 = vpop.f32.mrf.mxu0
      %v1038 = vadd.f32 %v916, %v1037
      %1039 = vmatmul.f32.gmra.mxu0 %v796
      %v1040 = vpop.f32.mrf.mxu0
      %v1041 = vadd.f32 %v919, %v1040
      %1042 = vmatmul.f32.gmra.mxu0 %v799
      %v1043 = vpop.f32.mrf.mxu0
      %v1044 = vadd.f32 %v922, %v1043
      %1045 = vmatmul.f32.gmra.mxu0 %v802
      %v1046 = vpop.f32.mrf.mxu0
      %v1047 = vadd.f32 %v925, %v1046
      %1048 = vmatmul.f32.gmra.mxu0 %v805
      %v1049 = vpop.f32.mrf.mxu0
      %v1050 = vadd.f32 %v928, %v1049
      %1051 = vmatmul.f32.gmra.mxu0 %v808
      %v1052 = vpop.f32.mrf.mxu0
      %v1053 = vadd.f32 %v931, %v1052
      %1054 = vmatmul.f32.gmra.mxu0 %v811
      %v1055 = vpop.f32.mrf.mxu0
      %v1056 = vadd.f32 %v934, %v1055
      %1057 = vmatmul.f32.gmra.mxu0 %v814
      %v1058 = vpop.f32.mrf.mxu0
      %v1059 = vadd.f32 %v937, %v1058
      %1060 = vmatmul.f32.gmra.mxu0 %v817
      %v1061 = vpop.f32.mrf.mxu0
      %v1062 = vadd.f32 %v940, %v1061
      %1063 = vmatmul.f32.gmra.mxu0 %v820
      %v1064 = vpop.f32.mrf.mxu0
      %v1065 = vadd.f32 %v943, %v1064
      %1066 = vmatmul.f32.gmra.mxu0 %v823
      %v1067 = vpop.f32.mrf.mxu0
      %v1068 = vadd.f32 %v946, %v1067
      %1069 = vmatmul.f32.gmra.mxu0 %v826
      %v1070 = vpop.f32.mrf.mxu0
      %v1071 = vadd.f32 %v949, %v1070
      %1072 = vmatmul.f32.gmra.mxu0 %v829
      %v1073 = vpop.f32.mrf.mxu0
      %v1074 = vadd.f32 %v952, %v1073
      %1075 = vmatmul.f32.gmra.mxu0 %v832
      %v1076 = vpop.f32.mrf.mxu0
      %v1077 = vadd.f32 %v955, %v1076
      %1078 = vmatmul.f32.gmra.mxu0 %v835
      %v1079 = vpop.f32.mrf.mxu0
      %v1080 = vadd.f32 %v958, %v1079
      %1081 = vmatmul.f32.gmra.mxu0 %v838
      %v1082 = vpop.f32.mrf.mxu0
      %v1083 = vadd.f32 %v961, %v1082
      %1084 = vmatmul.f32.gmra.mxu0 %v841
      %v1085 = vpop.f32.mrf.mxu0
      %v1086 = vadd.f32 %v964, %v1085
      %1087 = vmatmul.f32.gmra.mxu0 %v844
      %v1088 = vpop.f32.mrf.mxu0
      %v1089 = vadd.f32 %v967, %v1088
      %1090 = vmatmul.f32.gmra.mxu0 %v847
      %v1091 = vpop.f32.mrf.mxu0
      %v1092 = vadd.f32 %v970, %v1091
      %1093 = vmatmul.f32.gmra.mxu0 %v850
      %v1094 = vpop.f32.mrf.mxu0
      %v1095 = vadd.f32 %v973, %v1094
      %1096 = vmatmul.f32.gmra.mxu0 %v853
      %v1097 = vpop.f32.mrf.mxu0
      %v1098 = vadd.f32 %v976, %v1097
      %1099 = vmatmul.f32.gmra.mxu0 %v856
      %v1100 = vpop.f32.mrf.mxu0
      %v1101 = vadd.f32 %v979, %v1100
      %1102 = vmatmul.f32.gmra.mxu0 %v859
      %v1103 = vpop.f32.mrf.mxu0
      %v1104 = vadd.f32 %v982, %v1103
      %1105 = vmatmul.f32.gmra.mxu0 %v862
      %v1106 = vpop.f32.mrf.mxu0
      %v1107 = vadd.f32 %v985, %v1106
      %1108 = vmatmul.f32.gmra.mxu0 %v865
      %v1109 = vpop.f32.mrf.mxu0
      %v1110 = vadd.f32 %v988, %v1109
      %1111 = vmatmul.f32.gmra.mxu0 %v868
      %v1112 = vpop.f32.mrf.mxu0
      %v1113 = vadd.f32 %v991, %v1112
      %1114 = vdwg.mxu0
      %s1115 = scalar_lea.vmem %s1, 32
      %v1116 = vld [vmem:[%s1115] sm:$0xff]
      %v1117 = vld [vmem:[%s1115 + $0x8] sm:$0xf]
      %v1119 = vsel %vm779, %v772, 0
      %v1122 = vsel %vm779, %v773, 0
      %v1125 = vsel %vm876, %v1117, 0
      %1127 = vmatpush.msra.mxu0 0.0
      %1128 = vmatpush.msra.mxu0 0.0
      %1129 = vmatpush.msra.mxu0 0.0
      %1130 = vmatpush.msra.mxu0 0.0
      %1131 = vmatpush.msra.mxu0 0.0
      %1132 = vmatpush.msra.mxu0 0.0
      %1133 = vmatpush.msra.mxu0 0.0
      %1134 = vmatpush.msra.mxu0 0.0
      %1135 = vmatpush.msra.mxu0 0.0
      %1136 = vmatpush.msra.mxu0 0.0
      %1137 = vmatpush.msra.mxu0 0.0
      %1138 = vmatpush.msra.mxu0 0.0
      %1139 = vmatpush.msra.mxu0 0.0
      %1140 = vmatpush.msra.mxu0 0.0
      %1141 = vmatpush.msra.mxu0 %v1125
      %1142 = vmatpush.msra.mxu0 %v1116
      %1143 = vmatmul.f32.gmra.mxu0 %v787
      %v1144 = vpop.f32.mrf.mxu0
      %v1145 = vadd.f32 0.0, %v1144
      %1146 = vmatmul.f32.gmra.mxu0 %v790
      %v1147 = vpop.f32.mrf.mxu0
      %v1148 = vadd.f32 0.0, %v1147
      %1149 = vmatmul.f32.gmra.mxu0 %v793
      %v1150 = vpop.f32.mrf.mxu0
      %v1151 = vadd.f32 0.0, %v1150
      %1152 = vmatmul.f32.gmra.mxu0 %v796
      %v1153 = vpop.f32.mrf.mxu0
      %v1154 = vadd.f32 0.0, %v1153
      %1155 = vmatmul.f32.gmra.mxu0 %v799
      %v1156 = vpop.f32.mrf.mxu0
      %v1157 = vadd.f32 0.0, %v1156
      %1158 = vmatmul.f32.gmra.mxu0 %v802
      %v1159 = vpop.f32.mrf.mxu0
      %v1160 = vadd.f32 0.0, %v1159
      %1161 = vmatmul.f32.gmra.mxu0 %v805
      %v1162 = vpop.f32.mrf.mxu0
      %v1163 = vadd.f32 0.0, %v1162
      %1164 = vmatmul.f32.gmra.mxu0 %v808
      %v1165 = vpop.f32.mrf.mxu0
      %v1166 = vadd.f32 0.0, %v1165
      %1167 = vmatmul.f32.gmra.mxu0 %v811
      %v1168 = vpop.f32.mrf.mxu0
      %v1169 = vadd.f32 0.0, %v1168
      %1170 = vmatmul.f32.gmra.mxu0 %v814
      %v1171 = vpop.f32.mrf.mxu0
      %v1172 = vadd.f32 0.0, %v1171
      %1173 = vmatmul.f32.gmra.mxu0 %v817
      %v1174 = vpop.f32.mrf.mxu0
      %v1175 = vadd.f32 0.0, %v1174
      %1176 = vmatmul.f32.gmra.mxu0 %v820
      %v1177 = vpop.f32.mrf.mxu0
      %v1178 = vadd.f32 0.0, %v1177
      %1179 = vmatmul.f32.gmra.mxu0 %v823
      %v1180 = vpop.f32.mrf.mxu0
      %v1181 = vadd.f32 0.0, %v1180
      %1182 = vmatmul.f32.gmra.mxu0 %v826
      %v1183 = vpop.f32.mrf.mxu0
      %v1184 = vadd.f32 0.0, %v1183
      %1185 = vmatmul.f32.gmra.mxu0 %v829
      %v1186 = vpop.f32.mrf.mxu0
      %v1187 = vadd.f32 0.0, %v1186
      %1188 = vmatmul.f32.gmra.mxu0 %v832
      %v1189 = vpop.f32.mrf.mxu0
      %v1190 = vadd.f32 0.0, %v1189
      %1191 = vmatmul.f32.gmra.mxu0 %v835
      %v1192 = vpop.f32.mrf.mxu0
      %v1193 = vadd.f32 0.0, %v1192
      %1194 = vmatmul.f32.gmra.mxu0 %v838
      %v1195 = vpop.f32.mrf.mxu0
      %v1196 = vadd.f32 0.0, %v1195
      %1197 = vmatmul.f32.gmra.mxu0 %v841
      %v1198 = vpop.f32.mrf.mxu0
      %v1199 = vadd.f32 0.0, %v1198
      %1200 = vmatmul.f32.gmra.mxu0 %v844
      %v1201 = vpop.f32.mrf.mxu0
      %v1202 = vadd.f32 0.0, %v1201
      %1203 = vmatmul.f32.gmra.mxu0 %v847
      %v1204 = vpop.f32.mrf.mxu0
      %v1205 = vadd.f32 0.0, %v1204
      %1206 = vmatmul.f32.gmra.mxu0 %v850
      %v1207 = vpop.f32.mrf.mxu0
      %v1208 = vadd.f32 0.0, %v1207
      %1209 = vmatmul.f32.gmra.mxu0 %v853
      %v1210 = vpop.f32.mrf.mxu0
      %v1211 = vadd.f32 0.0, %v1210
      %1212 = vmatmul.f32.gmra.mxu0 %v856
      %v1213 = vpop.f32.mrf.mxu0
      %v1214 = vadd.f32 0.0, %v1213
      %1215 = vmatmul.f32.gmra.mxu0 %v859
      %v1216 = vpop.f32.mrf.mxu0
      %v1217 = vadd.f32 0.0, %v1216
      %1218 = vmatmul.f32.gmra.mxu0 %v862
      %v1219 = vpop.f32.mrf.mxu0
      %v1220 = vadd.f32 0.0, %v1219
      %1221 = vmatmul.f32.gmra.mxu0 %v865
      %v1222 = vpop.f32.mrf.mxu0
      %v1223 = vadd.f32 0.0, %v1222
      %1224 = vmatmul.f32.gmra.mxu0 %v868
      %v1225 = vpop.f32.mrf.mxu0
      %v1226 = vadd.f32 0.0, %v1225
      %1227 = vmatmul.f32.gmra.mxu0 %v871
      %v1228 = vpop.f32.mrf.mxu0
      %v1229 = vadd.f32 0.0, %v1228
      %1230 = vmatmul.f32.gmra.mxu0 %v874
      %v1231 = vpop.f32.mrf.mxu0
      %v1232 = vadd.f32 0.0, %v1231
      %1233 = vmatmul.f32.gmra.mxu0 %v1119
      %v1234 = vpop.f32.mrf.mxu0
      %v1235 = vadd.f32 0.0, %v1234
      %1236 = vmatmul.f32.gmra.mxu0 %v1122
      %v1237 = vpop.f32.mrf.mxu0
      %v1238 = vadd.f32 0.0, %v1237
      %1239 = vdwg.mxu0
      %v1240 = vadd.f32 %v1020, %v1145
      %v1241 = vadd.f32 %v1023, %v1148
      %v1242 = vadd.f32 %v1026, %v1151
      %v1243 = vadd.f32 %v1029, %v1154
      %v1244 = vadd.f32 %v1032, %v1157
      %v1245 = vadd.f32 %v1035, %v1160
      %v1246 = vadd.f32 %v1038, %v1163
      %v1247 = vadd.f32 %v1041, %v1166
      %v1248 = vadd.f32 %v1044, %v1169
      %v1249 = vadd.f32 %v1047, %v1172
      %v1250 = vadd.f32 %v1050, %v1175
      %v1251 = vadd.f32 %v1053, %v1178
      %v1252 = vadd.f32 %v1056, %v1181
      %v1253 = vadd.f32 %v1059, %v1184
      %v1254 = vadd.f32 %v1062, %v1187
      %v1255 = vadd.f32 %v1065, %v1190
      %v1256 = vadd.f32 %v1068, %v1193
      %v1257 = vadd.f32 %v1071, %v1196
      %v1258 = vadd.f32 %v1074, %v1199
      %v1259 = vadd.f32 %v1077, %v1202
      %v1260 = vadd.f32 %v1080, %v1205
      %v1261 = vadd.f32 %v1083, %v1208
      %v1262 = vadd.f32 %v1086, %v1211
      %v1263 = vadd.f32 %v1089, %v1214
      %v1264 = vadd.f32 %v1092, %v1217
      %v1265 = vadd.f32 %v1095, %v1220
      %v1266 = vadd.f32 %v1098, %v1223
      %v1267 = vadd.f32 %v1101, %v1226
      %v1268 = vadd.f32 %v1104, %v1229
      %v1269 = vadd.f32 %v1107, %v1232
      %v1270 = vadd.f32 %v1110, %v1235
      %v1271 = vadd.f32 %v1113, %v1238
      %v1272 = vld [vmem:[%s2] sm:$0x1]
      %v1274 = vperm.slane %v1272, 0
      %v1276 = vadd.f32 %v1240, %v1274
      %v1277 = vadd.f32 %v1241, %v1274
      %v1278 = vadd.f32 %v1242, %v1274
      %v1279 = vadd.f32 %v1243, %v1274
      %v1280 = vadd.f32 %v1244, %v1274
      %v1281 = vadd.f32 %v1245, %v1274
      %v1282 = vadd.f32 %v1246, %v1274
      %v1283 = vadd.f32 %v1247, %v1274
      %v1284 = vadd.f32 %v1248, %v1274
      %v1285 = vadd.f32 %v1249, %v1274
      %v1286 = vadd.f32 %v1250, %v1274
      %v1287 = vadd.f32 %v1251, %v1274
      %v1288 = vadd.f32 %v1252, %v1274
      %v1289 = vadd.f32 %v1253, %v1274
      %v1290 = vadd.f32 %v1254, %v1274
      %v1291 = vadd.f32 %v1255, %v1274
      %v1292 = vadd.f32 %v1256, %v1274
      %v1293 = vadd.f32 %v1257, %v1274
      %v1294 = vadd.f32 %v1258, %v1274
      %v1295 = vadd.f32 %v1259, %v1274
      %v1296 = vadd.f32 %v1260, %v1274
      %v1297 = vadd.f32 %v1261, %v1274
      %v1298 = vadd.f32 %v1262, %v1274
      %v1299 = vadd.f32 %v1263, %v1274
      %v1300 = vadd.f32 %v1264, %v1274
      %v1301 = vadd.f32 %v1265, %v1274
      %v1302 = vadd.f32 %v1266, %v1274
      %v1303 = vadd.f32 %v1267, %v1274
      %v1304 = vadd.f32 %v1268, %v1274
      %v1305 = vadd.f32 %v1269, %v1274
      %v1306 = vadd.f32 %v1270, %v1274
      %v1307 = vadd.f32 %v1271, %v1274
      %v1308 = vmin.f32 %v1276, 0.0
      %v1309 = vmin.f32 %v1277, 0.0
      %v1310 = vmin.f32 %v1278, 0.0
      %v1311 = vmin.f32 %v1279, 0.0
      %v1312 = vmin.f32 %v1280, 0.0
      %v1313 = vmin.f32 %v1281, 0.0
      %v1314 = vmin.f32 %v1282, 0.0
      %v1315 = vmin.f32 %v1283, 0.0
      %v1316 = vmin.f32 %v1284, 0.0
      %v1317 = vmin.f32 %v1285, 0.0
      %v1318 = vmin.f32 %v1286, 0.0
      %v1319 = vmin.f32 %v1287, 0.0
      %v1320 = vmin.f32 %v1288, 0.0
      %v1321 = vmin.f32 %v1289, 0.0
      %v1322 = vmin.f32 %v1290, 0.0
      %v1323 = vmin.f32 %v1291, 0.0
      %v1324 = vmin.f32 %v1292, 0.0
      %v1325 = vmin.f32 %v1293, 0.0
      %v1326 = vmin.f32 %v1294, 0.0
      %v1327 = vmin.f32 %v1295, 0.0
      %v1328 = vmin.f32 %v1296, 0.0
      %v1329 = vmin.f32 %v1297, 0.0
      %v1330 = vmin.f32 %v1298, 0.0
      %v1331 = vmin.f32 %v1299, 0.0
      %v1332 = vmin.f32 %v1300, 0.0
      %v1333 = vmin.f32 %v1301, 0.0
      %v1334 = vmin.f32 %v1302, 0.0
      %v1335 = vmin.f32 %v1303, 0.0
      %v1336 = vmin.f32 %v1304, 0.0
      %v1337 = vmin.f32 %v1305, 0.0
      %v1338 = vmin.f32 %v1306, 0.0
      %v1339 = vmin.f32 %v1307, 0.0
      %vm1340 = vcmp.gt.f32.partialorder %v1276, 0.0
      %vm1341 = vcmp.gt.f32.partialorder %v1277, 0.0
      %vm1342 = vcmp.gt.f32.partialorder %v1278, 0.0
      %vm1343 = vcmp.gt.f32.partialorder %v1279, 0.0
      %vm1344 = vcmp.gt.f32.partialorder %v1280, 0.0
      %vm1345 = vcmp.gt.f32.partialorder %v1281, 0.0
      %vm1346 = vcmp.gt.f32.partialorder %v1282, 0.0
      %vm1347 = vcmp.gt.f32.partialorder %v1283, 0.0
      %vm1348 = vcmp.gt.f32.partialorder %v1284, 0.0
      %vm1349 = vcmp.gt.f32.partialorder %v1285, 0.0
      %vm1350 = vcmp.gt.f32.partialorder %v1286, 0.0
      %vm1351 = vcmp.gt.f32.partialorder %v1287, 0.0
      %vm1352 = vcmp.gt.f32.partialorder %v1288, 0.0
      %vm1353 = vcmp.gt.f32.partialorder %v1289, 0.0
      %vm1354 = vcmp.gt.f32.partialorder %v1290, 0.0
      %vm1355 = vcmp.gt.f32.partialorder %v1291, 0.0
      %vm1356 = vcmp.gt.f32.partialorder %v1292, 0.0
      %vm1357 = vcmp.gt.f32.partialorder %v1293, 0.0
      %vm1358 = vcmp.gt.f32.partialorder %v1294, 0.0
      %vm1359 = vcmp.gt.f32.partialorder %v1295, 0.0
      %vm1360 = vcmp.gt.f32.partialorder %v1296, 0.0
      %vm1361 = vcmp.gt.f32.partialorder %v1297, 0.0
      %vm1362 = vcmp.gt.f32.partialorder %v1298, 0.0
      %vm1363 = vcmp.gt.f32.partialorder %v1299, 0.0
      %vm1364 = vcmp.gt.f32.partialorder %v1300, 0.0
      %vm1365 = vcmp.gt.f32.partialorder %v1301, 0.0
      %vm1366 = vcmp.gt.f32.partialorder %v1302, 0.0
      %vm1367 = vcmp.gt.f32.partialorder %v1303, 0.0
      %vm1368 = vcmp.gt.f32.partialorder %v1304, 0.0
      %vm1369 = vcmp.gt.f32.partialorder %v1305, 0.0
      %vm1370 = vcmp.gt.f32.partialorder %v1306, 0.0
      %vm1371 = vcmp.gt.f32.partialorder %v1307, 0.0
      %v1372 = vmul.f32 %v1308, 1.442695
      %v1373 = vpow.pop %v1372
      %v1374 = vmul.f32 %v1309, 1.442695
      %v1375 = vpow.pop %v1374
      %v1376 = vmul.f32 %v1310, 1.442695
      %v1377 = vpow.pop %v1376
      %v1378 = vmul.f32 %v1311, 1.442695
      %v1379 = vpow.pop %v1378
      %v1380 = vmul.f32 %v1312, 1.442695
      %v1381 = vpow.pop %v1380
      %v1382 = vmul.f32 %v1313, 1.442695
      %v1383 = vpow.pop %v1382
      %v1384 = vmul.f32 %v1314, 1.442695
      %v1385 = vpow.pop %v1384
      %v1386 = vmul.f32 %v1315, 1.442695
      %v1387 = vpow.pop %v1386
      %v1388 = vmul.f32 %v1316, 1.442695
      %v1389 = vpow.pop %v1388
      %v1390 = vmul.f32 %v1317, 1.442695
      %v1391 = vpow.pop %v1390
      %v1392 = vmul.f32 %v1318, 1.442695
      %v1393 = vpow.pop %v1392
      %v1394 = vmul.f32 %v1319, 1.442695
      %v1395 = vpow.pop %v1394
      %v1396 = vmul.f32 %v1320, 1.442695
      %v1397 = vpow.pop %v1396
      %v1398 = vmul.f32 %v1321, 1.442695
      %v1399 = vpow.pop %v1398
      %v1400 = vmul.f32 %v1322, 1.442695
      %v1401 = vpow.pop %v1400
      %v1402 = vmul.f32 %v1323, 1.442695
      %v1403 = vpow.pop %v1402
      %v1404 = vmul.f32 %v1324, 1.442695
      %v1405 = vpow.pop %v1404
      %v1406 = vmul.f32 %v1325, 1.442695
      %v1407 = vpow.pop %v1406
      %v1408 = vmul.f32 %v1326, 1.442695
      %v1409 = vpow.pop %v1408
      %v1410 = vmul.f32 %v1327, 1.442695
      %v1411 = vpow.pop %v1410
      %v1412 = vmul.f32 %v1328, 1.442695
      %v1413 = vpow.pop %v1412
      %v1414 = vmul.f32 %v1329, 1.442695
      %v1415 = vpow.pop %v1414
      %v1416 = vmul.f32 %v1330, 1.442695
      %v1417 = vpow.pop %v1416
      %v1418 = vmul.f32 %v1331, 1.442695
      %v1419 = vpow.pop %v1418
      %v1420 = vmul.f32 %v1332, 1.442695
      %v1421 = vpow.pop %v1420
      %v1422 = vmul.f32 %v1333, 1.442695
      %v1423 = vpow.pop %v1422
      %v1424 = vmul.f32 %v1334, 1.442695
      %v1425 = vpow.pop %v1424
      %v1426 = vmul.f32 %v1335, 1.442695
      %v1427 = vpow.pop %v1426
      %v1428 = vmul.f32 %v1336, 1.442695
      %v1429 = vpow.pop %v1428
      %v1430 = vmul.f32 %v1337, 1.442695
      %v1431 = vpow.pop %v1430
      %v1432 = vmul.f32 %v1338, 1.442695
      %v1433 = vpow.pop %v1432
      %v1434 = vmul.f32 %v1339, 1.442695
      %v1435 = vpow.pop %v1434
      %v1436 = vsub.f32 %v1373, 1.0
      %v1437 = vsub.f32 %v1375, 1.0
      %v1438 = vsub.f32 %v1377, 1.0
      %v1439 = vsub.f32 %v1379, 1.0
      %v1440 = vsub.f32 %v1381, 1.0
      %v1441 = vsub.f32 %v1383, 1.0
      %v1442 = vsub.f32 %v1385, 1.0
      %v1443 = vsub.f32 %v1387, 1.0
      %v1444 = vsub.f32 %v1389, 1.0
      %v1445 = vsub.f32 %v1391, 1.0
      %v1446 = vsub.f32 %v1393, 1.0
      %v1447 = vsub.f32 %v1395, 1.0
      %v1448 = vsub.f32 %v1397, 1.0
      %v1449 = vsub.f32 %v1399, 1.0
      %v1450 = vsub.f32 %v1401, 1.0
      %v1451 = vsub.f32 %v1403, 1.0
      %v1452 = vsub.f32 %v1405, 1.0
      %v1453 = vsub.f32 %v1407, 1.0
      %v1454 = vsub.f32 %v1409, 1.0
      %v1455 = vsub.f32 %v1411, 1.0
      %v1456 = vsub.f32 %v1413, 1.0
      %v1457 = vsub.f32 %v1415, 1.0
      %v1458 = vsub.f32 %v1417, 1.0
      %v1459 = vsub.f32 %v1419, 1.0
      %v1460 = vsub.f32 %v1421, 1.0
      %v1461 = vsub.f32 %v1423, 1.0
      %v1462 = vsub.f32 %v1425, 1.0
      %v1463 = vsub.f32 %v1427, 1.0
      %v1464 = vsub.f32 %v1429, 1.0
      %v1465 = vsub.f32 %v1431, 1.0
      %v1466 = vsub.f32 %v1433, 1.0
      %v1467 = vsub.f32 %v1435, 1.0
      %v1468 = vsel %vm1340, %v1276, %v1436
      %v1469 = vsel %vm1341, %v1277, %v1437
      %v1470 = vsel %vm1342, %v1278, %v1438
      %v1471 = vsel %vm1343, %v1279, %v1439
      %v1472 = vsel %vm1344, %v1280, %v1440
      %v1473 = vsel %vm1345, %v1281, %v1441
      %v1474 = vsel %vm1346, %v1282, %v1442
      %v1475 = vsel %vm1347, %v1283, %v1443
      %v1476 = vsel %vm1348, %v1284, %v1444
      %v1477 = vsel %vm1349, %v1285, %v1445
      %v1478 = vsel %vm1350, %v1286, %v1446
      %v1479 = vsel %vm1351, %v1287, %v1447
      %v1480 = vsel %vm1352, %v1288, %v1448
      %v1481 = vsel %vm1353, %v1289, %v1449
      %v1482 = vsel %vm1354, %v1290, %v1450
      %v1483 = vsel %vm1355, %v1291, %v1451
      %v1484 = vsel %vm1356, %v1292, %v1452
      %v1485 = vsel %vm1357, %v1293, %v1453
      %v1486 = vsel %vm1358, %v1294, %v1454
      %v1487 = vsel %vm1359, %v1295, %v1455
      %v1488 = vsel %vm1360, %v1296, %v1456
      %v1489 = vsel %vm1361, %v1297, %v1457
      %v1490 = vsel %vm1362, %v1298, %v1458
      %v1491 = vsel %vm1363, %v1299, %v1459
      %v1492 = vsel %vm1364, %v1300, %v1460
      %v1493 = vsel %vm1365, %v1301, %v1461
      %v1494 = vsel %vm1366, %v1302, %v1462
      %v1495 = vsel %vm1367, %v1303, %v1463
      %v1496 = vsel %vm1368, %v1304, %v1464
      %v1497 = vsel %vm1369, %v1305, %v1465
      %v1498 = vsel %vm1370, %v1306, %v1466
      %v1499 = vsel %vm1371, %v1307, %v1467
      %1500 = vst.msk [vmem:[%s192] sm:$0xff] %vm737, %v1468
      %1501 = vst.msk [vmem:[%s192 + $0x8] sm:$0xff] %vm737, %v1469
      %1502 = vst.msk [vmem:[%s192 + $0x10] sm:$0xff] %vm737, %v1470
      %1503 = vst.msk [vmem:[%s192 + $0x18] sm:$0xff] %vm737, %v1471
      %1504 = vst.msk [vmem:[%s192 + $0x20] sm:$0xff] %vm737, %v1472
      %1505 = vst.msk [vmem:[%s192 + $0x28] sm:$0xff] %vm737, %v1473
      %1506 = vst.msk [vmem:[%s192 + $0x30] sm:$0xff] %vm737, %v1474
      %1507 = vst.msk [vmem:[%s192 + $0x38] sm:$0xff] %vm737, %v1475
      %1508 = vst.msk [vmem:[%s192 + $0x40] sm:$0xff] %vm737, %v1476
      %1509 = vst.msk [vmem:[%s192 + $0x48] sm:$0xff] %vm737, %v1477
      %1510 = vst.msk [vmem:[%s192 + $0x50] sm:$0xff] %vm737, %v1478
      %1511 = vst.msk [vmem:[%s192 + $0x58] sm:$0xff] %vm737, %v1479
      %1512 = vst.msk [vmem:[%s192 + $0x60] sm:$0xff] %vm737, %v1480
      %1513 = vst.msk [vmem:[%s192 + $0x68] sm:$0xff] %vm737, %v1481
      %1514 = vst.msk [vmem:[%s192 + $0x70] sm:$0xff] %vm737, %v1482
      %1515 = vst.msk [vmem:[%s192 + $0x78] sm:$0xff] %vm737, %v1483
      %1516 = vst.msk [vmem:[%s192 + $0x80] sm:$0xff] %vm737, %v1484
      %1517 = vst.msk [vmem:[%s192 + $0x88] sm:$0xff] %vm737, %v1485
      %1518 = vst.msk [vmem:[%s192 + $0x90] sm:$0xff] %vm737, %v1486
      %1519 = vst.msk [vmem:[%s192 + $0x98] sm:$0xff] %vm737, %v1487
      %1520 = vst.msk [vmem:[%s192 + $0xa0] sm:$0xff] %vm737, %v1488
      %1521 = vst.msk [vmem:[%s192 + $0xa8] sm:$0xff] %vm737, %v1489
      %1522 = vst.msk [vmem:[%s192 + $0xb0] sm:$0xff] %vm737, %v1490
      %1523 = vst.msk [vmem:[%s192 + $0xb8] sm:$0xff] %vm737, %v1491
      %1524 = vst.msk [vmem:[%s192 + $0xc0] sm:$0xff] %vm737, %v1492
      %1525 = vst.msk [vmem:[%s192 + $0xc8] sm:$0xff] %vm737, %v1493
      %1526 = vst.msk [vmem:[%s192 + $0xd0] sm:$0xff] %vm737, %v1494
      %1527 = vst.msk [vmem:[%s192 + $0xd8] sm:$0xff] %vm737, %v1495
      %1528 = vst.msk [vmem:[%s192 + $0xe0] sm:$0xff] %vm737, %v1496
      %1529 = vst.msk [vmem:[%s192 + $0xe8] sm:$0xff] %vm737, %v1497
      %1530 = vst.msk [vmem:[%s192 + $0xf0] sm:$0xff] %vm737, %v1498
      %1531 = vst.msk [vmem:[%s192 + $0xf8] sm:$0xff] %vm737, %v1499
      %s1532 = smul.u32 32, %s19
      %p1533 = scmp.lt.s32.totalorder %s18, 1
      %s1534 = scalar_select %p1533, %s18, 1
      %p1535 = scmp.lt.s32.totalorder %s1532, 31
      %s1536 = scalar_select %p1535, %s1532, 31
      %s1537 = smul.addr %s1534, 32
      %s1538 = sadd.s32 %s1536, %s1537
      %s1539 = smul.addr %s1538, 8
      %s1540 = scalar_lea.vmem %s3, %s1539
      // Predicated region
      $region33: #{tpu_custom_call.1} parent=31 // pred_check
        %p1541 = pneg %p114
      $region34: #{tpu_custom_call.1} parent=31 // pred_check_branch
        %1543 = sbr.rel (%p1541) target = $region36
      $region35: #{tpu_custom_call.1} parent=31 // pred_region
        %s1544 = smul.u32 32, %s19
      $region36: #{tpu_custom_call.1} parent=31 // pred_fallthru
        _
    $region32: #{tpu_custom_call.1} parent=5 // pred_fallthru
      _
    %p1545 = scmp.le.s32.totalorder 2, %s9
    // Predicated region
    $region37: #{tpu_custom_call.1} parent=5 // pred_check
      %p1546 = pneg %p1545
    $region38: #{tpu_custom_call.1} parent=5 // pred_check_branch
      %1548 = sbr.rel (%p1546) target = $region40
    $region39: #{tpu_custom_call.1} parent=5 // pred_region
      %s1549 = ssub.s32 %s9, 2
      // Predicated region
      $region41: #{tpu_custom_call.1} parent=39 // pred_check
        %p1550 = pneg %p120
      $region42: #{tpu_custom_call.1} parent=39 // pred_check_branch
        %1552 = sbr.rel (%p1550) target = $region44
      $region43: #{tpu_custom_call.1} parent=39 // pred_region
        %s1553 = smul.u32 32, %s21
        %p1554 = scmp.lt.s32.totalorder %s20, 1
        %s1555 = scalar_select %p1554, %s20, 1
        %p1556 = scmp.lt.s32.totalorder %s1553, 31
        %s1557 = scalar_select %p1556, %s1553, 31
        %s1558 = smul.addr %s1555, 32
        %s1559 = sadd.s32 %s1557, %s1558
        %s1560 = smul.addr %s1559, 8
        %s1561 = scalar_lea.vmem %s3, %s1560
      $region44: #{tpu_custom_call.1} parent=39 // pred_fallthru
        _
    $region40: #{tpu_custom_call.1} parent=5 // pred_fallthru
      _
  $region6: #{tpu_custom_call.1} parent=0 // loop_footer
    %s13 = sadd.s32 1, %s9
  $region7: #{tpu_custom_call.1} parent=0 // loop_footer_branch
    %8 = sbr.rel target = $region3
  $region8: #{tpu_custom_call.1} parent=0 // loop_exit
    _

</llo_original>
